<compile_context>
chip_gen: v5e
topology: v5e:2x2
jax: 0.10.0
libtpu: 0.0.40
codegen_flags: <defaults>
</compile_context>

<pallas_src>
import jax
import jax.numpy as jnp
from jax.experimental import pallas as pl
from jax.experimental.pallas import tpu as pltpu

EPS = 1e-12


def _round_up(x, m):
    return ((x + m - 1) // m) * m


def bert_self_output_kernel(x_ref, res_ref, w_ref, p_ref, o_ref):
    # x_ref:   (tm, H) caller dtype -> cast to bf16 in-regs for the MXU
    # res_ref: (tm, H) caller dtype -> upcast to f32 for residual + LN
    # w_ref:   (H, H) bf16, grid-invariant (resident across grid steps)
    # p_ref:   (3, H) f32, packed [dense bias; LN gamma; LN beta]
    x = x_ref[...].astype(jnp.bfloat16)
    h = jnp.dot(x, w_ref[...], preferred_element_type=jnp.float32)

    p = p_ref[...]
    bias, gamma, beta = p[0:1, :], p[1:2, :], p[2:3, :]

    # TODO(synk): dropout(p=0.1) is identity in eval mode; training-mode dropout
    # would use pltpu.prng_seed / pltpu.prng_random_bits (omitted: inference).
    y = h + bias + res_ref[...].astype(jnp.float32)

    # LayerNorm over the hidden (lane) axis, eps=1e-12, statistics in f32.
    mean = jnp.mean(y, axis=-1, keepdims=True)
    centered = y - mean
    var = jnp.mean(centered * centered, axis=-1, keepdims=True)
    out = centered * jax.lax.rsqrt(var + EPS) * gamma + beta

    o_ref[...] = out.astype(o_ref.dtype)


def bert_self_output(hidden_states, input_tensor, w_t, b, gamma, beta, *, tm=512):
    """hidden_states, input_tensor: [N, H]; w_t: [H_in, H_out] (x @ W orientation)."""
    N, H = hidden_states.shape
    out_dtype = hidden_states.dtype

    # Parameter-sized one-time prep only (no full-activation HBM passes here):
    #   * weight cast to bf16 -> resident MXU operand at half DMA/VMEM cost
    #   * bias / gamma / beta packed into one (3, H) f32 grid-invariant operand
    w = w_t.astype(jnp.bfloat16)
    params = jnp.stack([b, gamma, beta]).astype(jnp.float32)

    # Row tile: large by default (512 -> ~85% of HBM roofline; fits v5e's
    # 16 MiB scoped-VMEM default even with f32 activation streams), clamped to
    # a multiple of 8 for small N, and capped so there are >= 2 row-blocks when
    # there is enough work to shard across both TensorCores on v7x.
    tm_eff = min(tm, _round_up(N, 8))
    if N > 256:
        tm_eff = min(tm_eff, max(256, _round_up(pl.cdiv(N, 2), 8)))
    grid = (pl.cdiv(N, tm_eff),)

    return pl.pallas_call(
        bert_self_output_kernel,
        out_shape=jax.ShapeDtypeStruct((N, H), out_dtype),
        grid_spec=pltpu.PrefetchScalarGridSpec(
            num_scalar_prefetch=0,
            grid=grid,
            in_specs=[
                pl.BlockSpec((tm_eff, H), lambda i: (i, 0)),  # x tile (caller dtype)
                pl.BlockSpec((tm_eff, H), lambda i: (i, 0)),  # residual tile (caller dtype)
                pl.BlockSpec((H, H), lambda i: (0, 0)),       # dense weight (bf16, resident)
                pl.BlockSpec((3, H), lambda i: (0, 0)),       # packed bias/gamma/beta (f32)
            ],
            out_specs=pl.BlockSpec((tm_eff, H), lambda i: (i, 0)),
        ),
        compiler_params=pltpu.CompilerParams(
            dimension_semantics=("parallel",)),
    )(hidden_states, input_tensor, w, params)


def reference(hidden_states, input_tensor, w_t, b, gamma, beta):
    # Same bf16 operand quantization as the kernel; f32 accumulate + LN.
    xh = hidden_states.astype(jnp.bfloat16).astype(jnp.float32)
    wh = w_t.astype(jnp.bfloat16).astype(jnp.float32)
    h = xh @ wh + b.astype(jnp.float32)
    y = h + input_tensor.astype(jnp.float32)
    mean = jnp.mean(y, axis=-1, keepdims=True)
    var = jnp.mean((y - mean) ** 2, axis=-1, keepdims=True)
    return (y - mean) * jax.lax.rsqrt(var + EPS) * gamma + beta


if __name__ == "__main__":
    # Small shapes consistent with the module: batch=2, seq=8, hidden=768.
    batch, seq, hidden = 2, 8, 768
    key = jax.random.PRNGKey(0)
    k1, k2, k3, k4 = jax.random.split(key, 4)

    hidden_states = jax.random.normal(k1, (batch, seq, hidden), jnp.float32)
    input_tensor = jax.random.normal(k2, (batch, seq, hidden), jnp.float32)

    # Deterministic parameter init (nn.Linear-style scale); w_t is [in, out].
    bound = 1.0 / (hidden ** 0.5)
    w_t = jax.random.uniform(k3, (hidden, hidden), jnp.float32, -bound, bound)
    b = jax.random.uniform(k4, (hidden,), jnp.float32, -bound, bound)
    gamma = jnp.ones((hidden,), jnp.float32)   # LayerNorm weight init
    beta = jnp.zeros((hidden,), jnp.float32)   # LayerNorm bias init

    x2 = hidden_states.reshape(batch * seq, hidden)
    r2 = input_tensor.reshape(batch * seq, hidden)

    out = bert_self_output(x2, r2, w_t, b, gamma, beta)
    out = jax.block_until_ready(out).reshape(batch, seq, hidden)

    ref = reference(x2, r2, w_t, b, gamma, beta).reshape(batch, seq, hidden)
    assert jnp.allclose(out, ref, atol=2e-3, rtol=2e-3), "mismatch vs reference"

    print("KERNEL_OK")
</pallas_src>

<mosaic_0001>
module attributes {stable_mosaic.version = 11 : i64} {
  func.func @bert_self_output_kernel(%arg0: i32, %arg1: memref<16x768xf32, #tpu.memory_space<vmem>>, %arg2: memref<16x768xf32, #tpu.memory_space<vmem>>, %arg3: memref<768x768xbf16, #tpu.memory_space<vmem>>, %arg4: memref<3x768xf32, #tpu.memory_space<vmem>>, %arg5: memref<16x768xf32, #tpu.memory_space<vmem>>) attributes {dimension_semantics = [#tpu.dimension_semantics<parallel>], iteration_bounds = array<i64: 1>, scalar_prefetch = 0 : i64, scratch_operands = 0 : i64, tpu.core_type = #tpu.core_type<tc>, window_params = [{transform_indices = @transform_0, window_bounds = array<i64: 16, 768>}, {transform_indices = @transform_1, window_bounds = array<i64: 16, 768>}, {pipeline_mode = #tpu.pipeline_mode<synchronous>, transform_indices = @transform_2, window_bounds = array<i64: 768, 768>}, {pipeline_mode = #tpu.pipeline_mode<synchronous>, transform_indices = @transform_3, window_bounds = array<i64: 3, 768>}, {transform_indices = @transform_4, window_bounds = array<i64: 16, 768>}]} {
    %c0 = arith.constant 0 : index
    %c0_0 = arith.constant 0 : index
    %0 = vector.load %arg1[%c0, %c0_0] : memref<16x768xf32, #tpu.memory_space<vmem>>, vector<16x768xf32>
    %1 = arith.truncf %0 : vector<16x768xf32> to vector<16x768xbf16>
    %c0_1 = arith.constant 0 : index
    %c0_2 = arith.constant 0 : index
    %2 = vector.load %arg3[%c0_1, %c0_2] : memref<768x768xbf16, #tpu.memory_space<vmem>>, vector<768x768xbf16>
    %cst = arith.constant dense<0.000000e+00> : vector<16x768xf32>
    %3 = tpu.matmul %1, %2, %cst {dimension_numbers = #tpu.dot_dimension_numbers<[1], [0], [0], [1], [0, 0, 1, 1], [], []>} : vector<16x768xbf16>, vector<768x768xbf16>, vector<16x768xf32> -> vector<16x768xf32>
    %c0_3 = arith.constant 0 : index
    %c0_4 = arith.constant 0 : index
    %4 = vector.load %arg4[%c0_3, %c0_4] : memref<3x768xf32, #tpu.memory_space<vmem>>, vector<3x768xf32>
    %5 = vector.extract_strided_slice %4 {offsets = [0, 0], sizes = [1, 768], strides = [1, 1]} : vector<3x768xf32> to vector<1x768xf32>
    %6 = vector.extract_strided_slice %4 {offsets = [1, 0], sizes = [1, 768], strides = [1, 1]} : vector<3x768xf32> to vector<1x768xf32>
    %7 = vector.extract_strided_slice %4 {offsets = [2, 0], sizes = [1, 768], strides = [1, 1]} : vector<3x768xf32> to vector<1x768xf32>
    %8 = vector.broadcast %5 : vector<1x768xf32> to vector<16x768xf32>
    %9 = arith.addf %3, %8 : vector<16x768xf32>
    %c0_5 = arith.constant 0 : index
    %c0_6 = arith.constant 0 : index
    %10 = vector.load %arg2[%c0_5, %c0_6] : memref<16x768xf32, #tpu.memory_space<vmem>>, vector<16x768xf32>
    %11 = arith.addf %9, %10 : vector<16x768xf32>
    %cst_7 = arith.constant dense<0.000000e+00> : vector<16xf32>
    %12 = vector.multi_reduction <add>, %11, %cst_7 [1] : vector<16x768xf32> to vector<16xf32>
    %13 = vector.shape_cast %12 : vector<16xf32> to vector<16x1xf32>
    %cst_8 = arith.constant 7.680000e+02 : f32
    %14 = vector.broadcast %cst_8 : f32 to vector<16x1xf32>
    %15 = arith.divf %13, %14 : vector<16x1xf32>
    %16 = vector.broadcast %15 : vector<16x1xf32> to vector<16x768xf32>
    %17 = arith.subf %11, %16 : vector<16x768xf32>
    %18 = arith.mulf %17, %17 : vector<16x768xf32>
    %cst_9 = arith.constant dense<0.000000e+00> : vector<16xf32>
    %19 = vector.multi_reduction <add>, %18, %cst_9 [1] : vector<16x768xf32> to vector<16xf32>
    %20 = vector.shape_cast %19 : vector<16xf32> to vector<16x1xf32>
    %cst_10 = arith.constant 7.680000e+02 : f32
    %21 = vector.broadcast %cst_10 : f32 to vector<16x1xf32>
    %22 = arith.divf %20, %21 : vector<16x1xf32>
    %cst_11 = arith.constant 9.99999996E-13 : f32
    %23 = vector.broadcast %cst_11 : f32 to vector<16x1xf32>
    %24 = arith.addf %22, %23 : vector<16x1xf32>
    %25 = math.rsqrt %24 : vector<16x1xf32>
    %26 = vector.broadcast %25 : vector<16x1xf32> to vector<16x768xf32>
    %27 = arith.mulf %17, %26 : vector<16x768xf32>
    %28 = vector.broadcast %6 : vector<1x768xf32> to vector<16x768xf32>
    %29 = arith.mulf %27, %28 : vector<16x768xf32>
    %30 = vector.broadcast %7 : vector<1x768xf32> to vector<16x768xf32>
    %31 = arith.addf %29, %30 : vector<16x768xf32>
    %c0_12 = arith.constant 0 : index
    %c0_13 = arith.constant 0 : index
    %32 = vector.load %arg5[%c0_12, %c0_13] : memref<16x768xf32, #tpu.memory_space<vmem>>, vector<16x768xf32>
    tpu.vector_store %arg5[%c0_12, %c0_13], %31 {strides = array<i32>} : memref<16x768xf32, #tpu.memory_space<vmem>>, vector<16x768xf32>,
    return
  }
  func.func @transform_0(%arg0: i32) -> (i32, i32) {
    %c0_i32 = arith.constant 0 : i32
    %c0_i32_0 = arith.constant 0 : i32
    return %arg0, %c0_i32 : i32, i32
  }
  func.func @transform_1(%arg0: i32) -> (i32, i32) {
    %c0_i32 = arith.constant 0 : i32
    %c0_i32_0 = arith.constant 0 : i32
    return %arg0, %c0_i32 : i32, i32
  }
  func.func @transform_2(%arg0: i32) -> (i32, i32) {
    %c0_i32 = arith.constant 0 : i32
    %c0_i32_0 = arith.constant 0 : i32
    %c0_i32_1 = arith.constant 0 : i32
    return %c0_i32, %c0_i32_0 : i32, i32
  }
  func.func @transform_3(%arg0: i32) -> (i32, i32) {
    %c0_i32 = arith.constant 0 : i32
    %c0_i32_0 = arith.constant 0 : i32
    %c0_i32_1 = arith.constant 0 : i32
    return %c0_i32, %c0_i32_0 : i32, i32
  }
  func.func @transform_4(%arg0: i32) -> (i32, i32) {
    %c0_i32 = arith.constant 0 : i32
    %c0_i32_0 = arith.constant 0 : i32
    return %arg0, %c0_i32 : i32, i32
  }
}

</mosaic_0001>

<llo_original>
// kernel: tpu_custom_call.1
$region0: #{tpu_custom_call.1}
  #allocation0 [shape = 'u32[]', space=smem, size = 0x4, offset = 0x4, fixed_abs, tag = 'smem constant byte address 0x4 - core index']
  #allocation1 [shape = 'u32[72,128]{1,0:T(1,128)}', space=vmem, size = 0x9000, scoped, tag = 'internal scratch']
  %s0 = inlined_call_operand.hbm [shape: f32[16,768], index: 0, kind: input, shape index: {}]
  %s1 = inlined_call_operand.hbm [shape: f32[16,768], index: 1, kind: input, shape index: {}]
  %s2 = inlined_call_operand.hbm [shape: bf16[768,768], index: 2, kind: input, shape index: {}]
  %s3 = inlined_call_operand.hbm [shape: f32[3,768], index: 3, kind: input, shape index: {}]
  %s4 = inlined_call_operand.hbm [shape: f32[16,768], index: 4, kind: output, shape index: {}]
  %s5 = sld [smem:[#allocation0]]
  $region42: #{tpu_custom_call.1} parent=0
    _
  %s7 = ssub.s32 1, %s5
  %s8 = scalar_select 0, %s7, %s5
  $region1: #{tpu_custom_call.1} parent=0
    #allocation2 [shape = 'u8[49152]{0}', space=vmem, size = 0xc000, scoped, tag = 'input window, operand 0, single buffered']
    #allocation3 [shape = 's32[1]{0}', space=sflag, size = 0x4, scoped, tag = 'scoped memory for tpu_custom_call.1']
    #allocation4 [shape = 's32[1]{0}', space=sflag, size = 0x4, scoped, tag = 'scoped memory for tpu_custom_call.1']
    #allocation5 [shape = 'u8[49152]{0}', space=vmem, size = 0xc000, scoped, tag = 'input window, operand 1, single buffered']
    #allocation6 [shape = 's32[1]{0}', space=sflag, size = 0x4, scoped, tag = 'scoped memory for tpu_custom_call.1']
    #allocation7 [shape = 'u8[1179648]{0}', space=vmem, size = 0x120000, scoped, tag = 'input window, operand 2, single buffered']
    #allocation8 [shape = 'u8[12288]{0}', space=vmem, size = 0x3000, scoped, tag = 'input window, operand 3, single buffered']
    #allocation9 [shape = 's32[1]{0}', space=sflag, size = 0x4, scoped, tag = 'scoped memory for tpu_custom_call.1']
    #allocation10 [shape = 'u8[49152]{0}', space=vmem, size = 0xc000, scoped, tag = 'output window, operand 0, single buffered']
    %9 = vsyncpa [#allocation3], 0
    %10 = vsyncpa [#allocation6], 0
    %11 = vsyncpa [#allocation9], 0
    %12 = vsyncpa [#allocation4], 0
    // Predicated region
    $region2: #{tpu_custom_call.1} parent=1 // pred_check
      _
    $region3: #{tpu_custom_call.1} parent=1 // pred_check_branch
      %14 = sbr.rel (0) target = $region5
    $region4: #{tpu_custom_call.1} parent=1 // pred_region
      %16 = vsyncadd [#allocation3], 0
      %s17 = sshll.u32 %s0, 4
      %s18 = int_to_ptr.hbm [resolvable:$true] %s17
      %s19 = sshll.u32 [#allocation2], 4
      %s20 = int_to_ptr.vmem [resolvable:$true] %s19
      %25 = dma.hbm_to_vmem [thread:$0]  %s18, 1536, %s20, [#allocation3], 768, 768, 48
    $region5: #{tpu_custom_call.1} parent=1 // pred_fallthru
      _
    // Predicated region
    $region6: #{tpu_custom_call.1} parent=1 // pred_check
      _
    $region7: #{tpu_custom_call.1} parent=1 // pred_check_branch
      %27 = sbr.rel (0) target = $region9
    $region8: #{tpu_custom_call.1} parent=1 // pred_region
      %29 = vsyncadd [#allocation6], 0
      %s30 = sshll.u32 %s1, 4
      %s31 = int_to_ptr.hbm [resolvable:$true] %s30
      %s32 = sshll.u32 [#allocation5], 4
      %s33 = int_to_ptr.vmem [resolvable:$true] %s32
      %38 = dma.hbm_to_vmem [thread:$0]  %s31, 1536, %s33, [#allocation6], 768, 768, 48
    $region9: #{tpu_custom_call.1} parent=1 // pred_fallthru
      _
    // Predicated region
    $region10: #{tpu_custom_call.1} parent=1 // pred_check
      _
    $region11: #{tpu_custom_call.1} parent=1 // pred_check_branch
      %40 = sbr.rel (0) target = $region13
    $region12: #{tpu_custom_call.1} parent=1 // pred_region
      %42 = vsyncadd [#allocation6], 0
      %s43 = sshll.u32 %s2, 4
      %s44 = int_to_ptr.hbm [resolvable:$true] %s43
      %s45 = sshll.u32 [#allocation7], 4
      %s46 = int_to_ptr.vmem [resolvable:$true] %s45
      %51 = dma.hbm_to_vmem [thread:$0]  %s44, 36864, %s46, [#allocation6], 384, 384, 24
    $region13: #{tpu_custom_call.1} parent=1 // pred_fallthru
      _
    // Predicated region
    $region14: #{tpu_custom_call.1} parent=1 // pred_check
      _
    $region15: #{tpu_custom_call.1} parent=1 // pred_check_branch
      %53 = sbr.rel (0) target = $region17
    $region16: #{tpu_custom_call.1} parent=1 // pred_region
      %55 = vsyncadd [#allocation9], 0
      %s57 = sshll.u32 %s3, 4
      %s58 = int_to_ptr.hbm [resolvable:$true] %s57
      %s59 = sshll.u32 [#allocation8], 4
      %s60 = int_to_ptr.vmem [resolvable:$true] %s59
      %62 = dma.hbm_to_vmem [thread:$0]  %s58, 384, %s60, [#allocation9]
    $region17: #{tpu_custom_call.1} parent=1 // pred_fallthru
      _
    // Predicated region
    $region18: #{tpu_custom_call.1} parent=1 // pred_check
      _
    $region19: #{tpu_custom_call.1} parent=1 // pred_check_branch
      %64 = sbr.rel (0) target = $region21
    $region20: #{tpu_custom_call.1} parent=1 // pred_region
      %66 = dma.done [#allocation3], 1536
    $region21: #{tpu_custom_call.1} parent=1 // pred_fallthru
      _
    // Predicated region
    $region22: #{tpu_custom_call.1} parent=1 // pred_check
      _
    $region23: #{tpu_custom_call.1} parent=1 // pred_check_branch
      %68 = sbr.rel (0) target = $region25
    $region24: #{tpu_custom_call.1} parent=1 // pred_region
      %70 = dma.done [#allocation6], 1536
    $region25: #{tpu_custom_call.1} parent=1 // pred_fallthru
      _
    // Predicated region
    $region26: #{tpu_custom_call.1} parent=1 // pred_check
      _
    $region27: #{tpu_custom_call.1} parent=1 // pred_check_branch
      %72 = sbr.rel (0) target = $region29
    $region28: #{tpu_custom_call.1} parent=1 // pred_region
      %74 = dma.done [#allocation6], 36864
    $region29: #{tpu_custom_call.1} parent=1 // pred_fallthru
      _
    // Predicated region
    $region30: #{tpu_custom_call.1} parent=1 // pred_check
      _
    $region31: #{tpu_custom_call.1} parent=1 // pred_check_branch
      %76 = sbr.rel (0) target = $region33
    $region32: #{tpu_custom_call.1} parent=1 // pred_region
      %78 = dma.done [#allocation9], 384
    $region33: #{tpu_custom_call.1} parent=1 // pred_fallthru
      _
    %v79 = vld [vmem:[#allocation2] sm:$0xff]
    %v80 = vld [vmem:[#allocation2 + $0x8] sm:$0xff]
    %v81 = vld [vmem:[#allocation2 + $0x10] sm:$0xff]
    %v82 = vld [vmem:[#allocation2 + $0x18] sm:$0xff]
    %v83 = vld [vmem:[#allocation2 + $0x20] sm:$0xff]
    %v84 = vld [vmem:[#allocation2 + $0x28] sm:$0xff]
    %v85 = vld [vmem:[#allocation2 + $0x30] sm:$0xff]
    %v86 = vld [vmem:[#allocation2 + $0x38] sm:$0xff]
    %v87 = vld [vmem:[#allocation2 + $0x40] sm:$0xff]
    %v88 = vld [vmem:[#allocation2 + $0x48] sm:$0xff]
    %v89 = vld [vmem:[#allocation2 + $0x50] sm:$0xff]
    %v90 = vld [vmem:[#allocation2 + $0x58] sm:$0xff]
    %v91 = vpack.c.bf16 %v85, %v79
    %v92 = vpack.c.bf16 %v86, %v80
    %v93 = vpack.c.bf16 %v87, %v81
    %v94 = vpack.c.bf16 %v88, %v82
    %v95 = vpack.c.bf16 %v89, %v83
    %v96 = vpack.c.bf16 %v90, %v84
    %v97 = vld [vmem:[#allocation7] sm:$0xff]
    %v98 = vld [vmem:[#allocation7 + $0x8] sm:$0xff]
    %v99 = vld [vmem:[#allocation7 + $0x10] sm:$0xff]
    %v100 = vld [vmem:[#allocation7 + $0x18] sm:$0xff]
    %v101 = vld [vmem:[#allocation7 + $0x20] sm:$0xff]
    %v102 = vld [vmem:[#allocation7 + $0x28] sm:$0xff]
    %v103 = vld [vmem:[#allocation7 + $0x30] sm:$0xff]
    %v104 = vld [vmem:[#allocation7 + $0x38] sm:$0xff]
    %v105 = vld [vmem:[#allocation7 + $0x40] sm:$0xff]
    %v106 = vld [vmem:[#allocation7 + $0x48] sm:$0xff]
    %v107 = vld [vmem:[#allocation7 + $0x50] sm:$0xff]
    %v108 = vld [vmem:[#allocation7 + $0x58] sm:$0xff]
    %v109 = vld [vmem:[#allocation7 + $0x60] sm:$0xff]
    %v110 = vld [vmem:[#allocation7 + $0x68] sm:$0xff]
    %v111 = vld [vmem:[#allocation7 + $0x70] sm:$0xff]
    %v112 = vld [vmem:[#allocation7 + $0x78] sm:$0xff]
    %v113 = vld [vmem:[#allocation7 + $0x80] sm:$0xff]
    %v114 = vld [vmem:[#allocation7 + $0x88] sm:$0xff]
    %v115 = vld [vmem:[#allocation7 + $0x90] sm:$0xff]
    %v116 = vld [vmem:[#allocation7 + $0x98] sm:$0xff]
    %v117 = vld [vmem:[#allocation7 + $0xa0] sm:$0xff]
    %v118 = vld [vmem:[#allocation7 + $0xa8] sm:$0xff]
    %v119 = vld [vmem:[#allocation7 + $0xb0] sm:$0xff]
    %v120 = vld [vmem:[#allocation7 + $0xb8] sm:$0xff]
    %v121 = vld [vmem:[#allocation7 + $0xc0] sm:$0xff]
    %v122 = vld [vmem:[#allocation7 + $0xc8] sm:$0xff]
    %v123 = vld [vmem:[#allocation7 + $0xd0] sm:$0xff]
    %v124 = vld [vmem:[#allocation7 + $0xd8] sm:$0xff]
    %v125 = vld [vmem:[#allocation7 + $0xe0] sm:$0xff]
    %v126 = vld [vmem:[#allocation7 + $0xe8] sm:$0xff]
    %v127 = vld [vmem:[#allocation7 + $0xf0] sm:$0xff]
    %v128 = vld [vmem:[#allocation7 + $0xf8] sm:$0xff]
    %v129 = vld [vmem:[#allocation7 + $0x100] sm:$0xff]
    %v130 = vld [vmem:[#allocation7 + $0x108] sm:$0xff]
    %v131 = vld [vmem:[#allocation7 + $0x110] sm:$0xff]
    %v132 = vld [vmem:[#allocation7 + $0x118] sm:$0xff]
    %v133 = vld [vmem:[#allocation7 + $0x120] sm:$0xff]
    %v134 = vld [vmem:[#allocation7 + $0x128] sm:$0xff]
    %v135 = vld [vmem:[#allocation7 + $0x130] sm:$0xff]
    %v136 = vld [vmem:[#allocation7 + $0x138] sm:$0xff]
    %v137 = vld [vmem:[#allocation7 + $0x140] sm:$0xff]
    %v138 = vld [vmem:[#allocation7 + $0x148] sm:$0xff]
    %v139 = vld [vmem:[#allocation7 + $0x150] sm:$0xff]
    %v140 = vld [vmem:[#allocation7 + $0x158] sm:$0xff]
    %v141 = vld [vmem:[#allocation7 + $0x160] sm:$0xff]
    %v142 = vld [vmem:[#allocation7 + $0x168] sm:$0xff]
    %v143 = vld [vmem:[#allocation7 + $0x170] sm:$0xff]
    %v144 = vld [vmem:[#allocation7 + $0x178] sm:$0xff]
    %v145 = vld [vmem:[#allocation7 + $0x180] sm:$0xff]
    %v146 = vld [vmem:[#allocation7 + $0x188] sm:$0xff]
    %v147 = vld [vmem:[#allocation7 + $0x190] sm:$0xff]
    %v148 = vld [vmem:[#allocation7 + $0x198] sm:$0xff]
    %v149 = vld [vmem:[#allocation7 + $0x1a0] sm:$0xff]
    %v150 = vld [vmem:[#allocation7 + $0x1a8] sm:$0xff]
    %v151 = vld [vmem:[#allocation7 + $0x1b0] sm:$0xff]
    %v152 = vld [vmem:[#allocation7 + $0x1b8] sm:$0xff]
    %v153 = vld [vmem:[#allocation7 + $0x1c0] sm:$0xff]
    %v154 = vld [vmem:[#allocation7 + $0x1c8] sm:$0xff]
    %v155 = vld [vmem:[#allocation7 + $0x1d0] sm:$0xff]
    %v156 = vld [vmem:[#allocation7 + $0x1d8] sm:$0xff]
    %v157 = vld [vmem:[#allocation7 + $0x1e0] sm:$0xff]
    %v158 = vld [vmem:[#allocation7 + $0x1e8] sm:$0xff]
    %v159 = vld [vmem:[#allocation7 + $0x1f0] sm:$0xff]
    %v160 = vld [vmem:[#allocation7 + $0x1f8] sm:$0xff]
    %v161 = vld [vmem:[#allocation7 + $0x200] sm:$0xff]
    %v162 = vld [vmem:[#allocation7 + $0x208] sm:$0xff]
    %v163 = vld [vmem:[#allocation7 + $0x210] sm:$0xff]
    %v164 = vld [vmem:[#allocation7 + $0x218] sm:$0xff]
    %v165 = vld [vmem:[#allocation7 + $0x220] sm:$0xff]
    %v166 = vld [vmem:[#allocation7 + $0x228] sm:$0xff]
    %v167 = vld [vmem:[#allocation7 + $0x230] sm:$0xff]
    %v168 = vld [vmem:[#allocation7 + $0x238] sm:$0xff]
    %v169 = vld [vmem:[#allocation7 + $0x240] sm:$0xff]
    %v170 = vld [vmem:[#allocation7 + $0x248] sm:$0xff]
    %v171 = vld [vmem:[#allocation7 + $0x250] sm:$0xff]
    %v172 = vld [vmem:[#allocation7 + $0x258] sm:$0xff]
    %v173 = vld [vmem:[#allocation7 + $0x260] sm:$0xff]
    %v174 = vld [vmem:[#allocation7 + $0x268] sm:$0xff]
    %v175 = vld [vmem:[#allocation7 + $0x270] sm:$0xff]
    %v176 = vld [vmem:[#allocation7 + $0x278] sm:$0xff]
    %v177 = vld [vmem:[#allocation7 + $0x280] sm:$0xff]
    %v178 = vld [vmem:[#allocation7 + $0x288] sm:$0xff]
    %v179 = vld [vmem:[#allocation7 + $0x290] sm:$0xff]
    %v180 = vld [vmem:[#allocation7 + $0x298] sm:$0xff]
    %v181 = vld [vmem:[#allocation7 + $0x2a0] sm:$0xff]
    %v182 = vld [vmem:[#allocation7 + $0x2a8] sm:$0xff]
    %v183 = vld [vmem:[#allocation7 + $0x2b0] sm:$0xff]
    %v184 = vld [vmem:[#allocation7 + $0x2b8] sm:$0xff]
    %v185 = vld [vmem:[#allocation7 + $0x2c0] sm:$0xff]
    %v186 = vld [vmem:[#allocation7 + $0x2c8] sm:$0xff]
    %v187 = vld [vmem:[#allocation7 + $0x2d0] sm:$0xff]
    %v188 = vld [vmem:[#allocation7 + $0x2d8] sm:$0xff]
    %v189 = vld [vmem:[#allocation7 + $0x2e0] sm:$0xff]
    %v190 = vld [vmem:[#allocation7 + $0x2e8] sm:$0xff]
    %v191 = vld [vmem:[#allocation7 + $0x2f0] sm:$0xff]
    %v192 = vld [vmem:[#allocation7 + $0x2f8] sm:$0xff]
    %v193 = vld [vmem:[#allocation7 + $0x300] sm:$0xff]
    %v194 = vld [vmem:[#allocation7 + $0x308] sm:$0xff]
    %v195 = vld [vmem:[#allocation7 + $0x310] sm:$0xff]
    %v196 = vld [vmem:[#allocation7 + $0x318] sm:$0xff]
    %v197 = vld [vmem:[#allocation7 + $0x320] sm:$0xff]
    %v198 = vld [vmem:[#allocation7 + $0x328] sm:$0xff]
    %v199 = vld [vmem:[#allocation7 + $0x330] sm:$0xff]
    %v200 = vld [vmem:[#allocation7 + $0x338] sm:$0xff]
    %v201 = vld [vmem:[#allocation7 + $0x340] sm:$0xff]
    %v202 = vld [vmem:[#allocation7 + $0x348] sm:$0xff]
    %v203 = vld [vmem:[#allocation7 + $0x350] sm:$0xff]
    %v204 = vld [vmem:[#allocation7 + $0x358] sm:$0xff]
    %v205 = vld [vmem:[#allocation7 + $0x360] sm:$0xff]
    %v206 = vld [vmem:[#allocation7 + $0x368] sm:$0xff]
    %v207 = vld [vmem:[#allocation7 + $0x370] sm:$0xff]
    %v208 = vld [vmem:[#allocation7 + $0x378] sm:$0xff]
    %v209 = vld [vmem:[#allocation7 + $0x380] sm:$0xff]
    %v210 = vld [vmem:[#allocation7 + $0x388] sm:$0xff]
    %v211 = vld [vmem:[#allocation7 + $0x390] sm:$0xff]
    %v212 = vld [vmem:[#allocation7 + $0x398] sm:$0xff]
    %v213 = vld [vmem:[#allocation7 + $0x3a0] sm:$0xff]
    %v214 = vld [vmem:[#allocation7 + $0x3a8] sm:$0xff]
    %v215 = vld [vmem:[#allocation7 + $0x3b0] sm:$0xff]
    %v216 = vld [vmem:[#allocation7 + $0x3b8] sm:$0xff]
    %v217 = vld [vmem:[#allocation7 + $0x3c0] sm:$0xff]
    %v218 = vld [vmem:[#allocation7 + $0x3c8] sm:$0xff]
    %v219 = vld [vmem:[#allocation7 + $0x3d0] sm:$0xff]
    %v220 = vld [vmem:[#allocation7 + $0x3d8] sm:$0xff]
    %v221 = vld [vmem:[#allocation7 + $0x3e0] sm:$0xff]
    %v222 = vld [vmem:[#allocation7 + $0x3e8] sm:$0xff]
    %v223 = vld [vmem:[#allocation7 + $0x3f0] sm:$0xff]
    %v224 = vld [vmem:[#allocation7 + $0x3f8] sm:$0xff]
    %v225 = vld [vmem:[#allocation7 + $0x400] sm:$0xff]
    %v226 = vld [vmem:[#allocation7 + $0x408] sm:$0xff]
    %v227 = vld [vmem:[#allocation7 + $0x410] sm:$0xff]
    %v228 = vld [vmem:[#allocation7 + $0x418] sm:$0xff]
    %v229 = vld [vmem:[#allocation7 + $0x420] sm:$0xff]
    %v230 = vld [vmem:[#allocation7 + $0x428] sm:$0xff]
    %v231 = vld [vmem:[#allocation7 + $0x430] sm:$0xff]
    %v232 = vld [vmem:[#allocation7 + $0x438] sm:$0xff]
    %v233 = vld [vmem:[#allocation7 + $0x440] sm:$0xff]
    %v234 = vld [vmem:[#allocation7 + $0x448] sm:$0xff]
    %v235 = vld [vmem:[#allocation7 + $0x450] sm:$0xff]
    %v236 = vld [vmem:[#allocation7 + $0x458] sm:$0xff]
    %v237 = vld [vmem:[#allocation7 + $0x460] sm:$0xff]
    %v238 = vld [vmem:[#allocation7 + $0x468] sm:$0xff]
    %v239 = vld [vmem:[#allocation7 + $0x470] sm:$0xff]
    %v240 = vld [vmem:[#allocation7 + $0x478] sm:$0xff]
    %v241 = vld [vmem:[#allocation7 + $0x480] sm:$0xff]
    %v242 = vld [vmem:[#allocation7 + $0x488] sm:$0xff]
    %v243 = vld [vmem:[#allocation7 + $0x490] sm:$0xff]
    %v244 = vld [vmem:[#allocation7 + $0x498] sm:$0xff]
    %v245 = vld [vmem:[#allocation7 + $0x4a0] sm:$0xff]
    %v246 = vld [vmem:[#allocation7 + $0x4a8] sm:$0xff]
    %v247 = vld [vmem:[#allocation7 + $0x4b0] sm:$0xff]
    %v248 = vld [vmem:[#allocation7 + $0x4b8] sm:$0xff]
    %v249 = vld [vmem:[#allocation7 + $0x4c0] sm:$0xff]
    %v250 = vld [vmem:[#allocation7 + $0x4c8] sm:$0xff]
    %v251 = vld [vmem:[#allocation7 + $0x4d0] sm:$0xff]
    %v252 = vld [vmem:[#allocation7 + $0x4d8] sm:$0xff]
    %v253 = vld [vmem:[#allocation7 + $0x4e0] sm:$0xff]
    %v254 = vld [vmem:[#allocation7 + $0x4e8] sm:$0xff]
    %v255 = vld [vmem:[#allocation7 + $0x4f0] sm:$0xff]
    %v256 = vld [vmem:[#allocation7 + $0x4f8] sm:$0xff]
    %v257 = vld [vmem:[#allocation7 + $0x500] sm:$0xff]
    %v258 = vld [vmem:[#allocation7 + $0x508] sm:$0xff]
    %v259 = vld [vmem:[#allocation7 + $0x510] sm:$0xff]
    %v260 = vld [vmem:[#allocation7 + $0x518] sm:$0xff]
    %v261 = vld [vmem:[#allocation7 + $0x520] sm:$0xff]
    %v262 = vld [vmem:[#allocation7 + $0x528] sm:$0xff]
    %v263 = vld [vmem:[#allocation7 + $0x530] sm:$0xff]
    %v264 = vld [vmem:[#allocation7 + $0x538] sm:$0xff]
    %v265 = vld [vmem:[#allocation7 + $0x540] sm:$0xff]
    %v266 = vld [vmem:[#allocation7 + $0x548] sm:$0xff]
    %v267 = vld [vmem:[#allocation7 + $0x550] sm:$0xff]
    %v268 = vld [vmem:[#allocation7 + $0x558] sm:$0xff]
    %v269 = vld [vmem:[#allocation7 + $0x560] sm:$0xff]
    %v270 = vld [vmem:[#allocation7 + $0x568] sm:$0xff]
    %v271 = vld [vmem:[#allocation7 + $0x570] sm:$0xff]
    %v272 = vld [vmem:[#allocation7 + $0x578] sm:$0xff]
    %v273 = vld [vmem:[#allocation7 + $0x580] sm:$0xff]
    %v274 = vld [vmem:[#allocation7 + $0x588] sm:$0xff]
    %v275 = vld [vmem:[#allocation7 + $0x590] sm:$0xff]
    %v276 = vld [vmem:[#allocation7 + $0x598] sm:$0xff]
    %v277 = vld [vmem:[#allocation7 + $0x5a0] sm:$0xff]
    %v278 = vld [vmem:[#allocation7 + $0x5a8] sm:$0xff]
    %v279 = vld [vmem:[#allocation7 + $0x5b0] sm:$0xff]
    %v280 = vld [vmem:[#allocation7 + $0x5b8] sm:$0xff]
    %v281 = vld [vmem:[#allocation7 + $0x5c0] sm:$0xff]
    %v282 = vld [vmem:[#allocation7 + $0x5c8] sm:$0xff]
    %v283 = vld [vmem:[#allocation7 + $0x5d0] sm:$0xff]
    %v284 = vld [vmem:[#allocation7 + $0x5d8] sm:$0xff]
    %v285 = vld [vmem:[#allocation7 + $0x5e0] sm:$0xff]
    %v286 = vld [vmem:[#allocation7 + $0x5e8] sm:$0xff]
    %v287 = vld [vmem:[#allocation7 + $0x5f0] sm:$0xff]
    %v288 = vld [vmem:[#allocation7 + $0x5f8] sm:$0xff]
    %v289 = vld [vmem:[#allocation7 + $0x600] sm:$0xff]
    %v290 = vld [vmem:[#allocation7 + $0x608] sm:$0xff]
    %v291 = vld [vmem:[#allocation7 + $0x610] sm:$0xff]
    %v292 = vld [vmem:[#allocation7 + $0x618] sm:$0xff]
    %v293 = vld [vmem:[#allocation7 + $0x620] sm:$0xff]
    %v294 = vld [vmem:[#allocation7 + $0x628] sm:$0xff]
    %v295 = vld [vmem:[#allocation7 + $0x630] sm:$0xff]
    %v296 = vld [vmem:[#allocation7 + $0x638] sm:$0xff]
    %v297 = vld [vmem:[#allocation7 + $0x640] sm:$0xff]
    %v298 = vld [vmem:[#allocation7 + $0x648] sm:$0xff]
    %v299 = vld [vmem:[#allocation7 + $0x650] sm:$0xff]
    %v300 = vld [vmem:[#allocation7 + $0x658] sm:$0xff]
    %v301 = vld [vmem:[#allocation7 + $0x660] sm:$0xff]
    %v302 = vld [vmem:[#allocation7 + $0x668] sm:$0xff]
    %v303 = vld [vmem:[#allocation7 + $0x670] sm:$0xff]
    %v304 = vld [vmem:[#allocation7 + $0x678] sm:$0xff]
    %v305 = vld [vmem:[#allocation7 + $0x680] sm:$0xff]
    %v306 = vld [vmem:[#allocation7 + $0x688] sm:$0xff]
    %v307 = vld [vmem:[#allocation7 + $0x690] sm:$0xff]
    %v308 = vld [vmem:[#allocation7 + $0x698] sm:$0xff]
    %v309 = vld [vmem:[#allocation7 + $0x6a0] sm:$0xff]
    %v310 = vld [vmem:[#allocation7 + $0x6a8] sm:$0xff]
    %v311 = vld [vmem:[#allocation7 + $0x6b0] sm:$0xff]
    %v312 = vld [vmem:[#allocation7 + $0x6b8] sm:$0xff]
    %v313 = vld [vmem:[#allocation7 + $0x6c0] sm:$0xff]
    %v314 = vld [vmem:[#allocation7 + $0x6c8] sm:$0xff]
    %v315 = vld [vmem:[#allocation7 + $0x6d0] sm:$0xff]
    %v316 = vld [vmem:[#allocation7 + $0x6d8] sm:$0xff]
    %v317 = vld [vmem:[#allocation7 + $0x6e0] sm:$0xff]
    %v318 = vld [vmem:[#allocation7 + $0x6e8] sm:$0xff]
    %v319 = vld [vmem:[#allocation7 + $0x6f0] sm:$0xff]
    %v320 = vld [vmem:[#allocation7 + $0x6f8] sm:$0xff]
    %v321 = vld [vmem:[#allocation7 + $0x700] sm:$0xff]
    %v322 = vld [vmem:[#allocation7 + $0x708] sm:$0xff]
    %v323 = vld [vmem:[#allocation7 + $0x710] sm:$0xff]
    %v324 = vld [vmem:[#allocation7 + $0x718] sm:$0xff]
    %v325 = vld [vmem:[#allocation7 + $0x720] sm:$0xff]
    %v326 = vld [vmem:[#allocation7 + $0x728] sm:$0xff]
    %v327 = vld [vmem:[#allocation7 + $0x730] sm:$0xff]
    %v328 = vld [vmem:[#allocation7 + $0x738] sm:$0xff]
    %v329 = vld [vmem:[#allocation7 + $0x740] sm:$0xff]
    %v330 = vld [vmem:[#allocation7 + $0x748] sm:$0xff]
    %v331 = vld [vmem:[#allocation7 + $0x750] sm:$0xff]
    %v332 = vld [vmem:[#allocation7 + $0x758] sm:$0xff]
    %v333 = vld [vmem:[#allocation7 + $0x760] sm:$0xff]
    %v334 = vld [vmem:[#allocation7 + $0x768] sm:$0xff]
    %v335 = vld [vmem:[#allocation7 + $0x770] sm:$0xff]
    %v336 = vld [vmem:[#allocation7 + $0x778] sm:$0xff]
    %v337 = vld [vmem:[#allocation7 + $0x780] sm:$0xff]
    %v338 = vld [vmem:[#allocation7 + $0x788] sm:$0xff]
    %v339 = vld [vmem:[#allocation7 + $0x790] sm:$0xff]
    %v340 = vld [vmem:[#allocation7 + $0x798] sm:$0xff]
    %v341 = vld [vmem:[#allocation7 + $0x7a0] sm:$0xff]
    %v342 = vld [vmem:[#allocation7 + $0x7a8] sm:$0xff]
    %v343 = vld [vmem:[#allocation7 + $0x7b0] sm:$0xff]
    %v344 = vld [vmem:[#allocation7 + $0x7b8] sm:$0xff]
    %v345 = vld [vmem:[#allocation7 + $0x7c0] sm:$0xff]
    %v346 = vld [vmem:[#allocation7 + $0x7c8] sm:$0xff]
    %v347 = vld [vmem:[#allocation7 + $0x7d0] sm:$0xff]
    %v348 = vld [vmem:[#allocation7 + $0x7d8] sm:$0xff]
    %v349 = vld [vmem:[#allocation7 + $0x7e0] sm:$0xff]
    %v350 = vld [vmem:[#allocation7 + $0x7e8] sm:$0xff]
    %v351 = vld [vmem:[#allocation7 + $0x7f0] sm:$0xff]
    %v352 = vld [vmem:[#allocation7 + $0x7f8] sm:$0xff]
    %v353 = vld [vmem:[#allocation7 + $0x800] sm:$0xff]
    %v354 = vld [vmem:[#allocation7 + $0x808] sm:$0xff]
    %v355 = vld [vmem:[#allocation7 + $0x810] sm:$0xff]
    %v356 = vld [vmem:[#allocation7 + $0x818] sm:$0xff]
    %v357 = vld [vmem:[#allocation7 + $0x820] sm:$0xff]
    %v358 = vld [vmem:[#allocation7 + $0x828] sm:$0xff]
    %v359 = vld [vmem:[#allocation7 + $0x830] sm:$0xff]
    %v360 = vld [vmem:[#allocation7 + $0x838] sm:$0xff]
    %v361 = vld [vmem:[#allocation7 + $0x840] sm:$0xff]
    %v362 = vld [vmem:[#allocation7 + $0x848] sm:$0xff]
    %v363 = vld [vmem:[#allocation7 + $0x850] sm:$0xff]
    %v364 = vld [vmem:[#allocation7 + $0x858] sm:$0xff]
    %v365 = vld [vmem:[#allocation7 + $0x860] sm:$0xff]
    %v366 = vld [vmem:[#allocation7 + $0x868] sm:$0xff]
    %v367 = vld [vmem:[#allocation7 + $0x870] sm:$0xff]
    %v368 = vld [vmem:[#allocation7 + $0x878] sm:$0xff]
    %v369 = vld [vmem:[#allocation7 + $0x880] sm:$0xff]
    %v370 = vld [vmem:[#allocation7 + $0x888] sm:$0xff]
    %v371 = vld [vmem:[#allocation7 + $0x890] sm:$0xff]
    %v372 = vld [vmem:[#allocation7 + $0x898] sm:$0xff]
    %v373 = vld [vmem:[#allocation7 + $0x8a0] sm:$0xff]
    %v374 = vld [vmem:[#allocation7 + $0x8a8] sm:$0xff]
    %v375 = vld [vmem:[#allocation7 + $0x8b0] sm:$0xff]
    %v376 = vld [vmem:[#allocation7 + $0x8b8] sm:$0xff]
    %v377 = vld [vmem:[#allocation7 + $0x8c0] sm:$0xff]
    %v378 = vld [vmem:[#allocation7 + $0x8c8] sm:$0xff]
    %v379 = vld [vmem:[#allocation7 + $0x8d0] sm:$0xff]
    %v380 = vld [vmem:[#allocation7 + $0x8d8] sm:$0xff]
    %v381 = vld [vmem:[#allocation7 + $0x8e0] sm:$0xff]
    %v382 = vld [vmem:[#allocation7 + $0x8e8] sm:$0xff]
    %v383 = vld [vmem:[#allocation7 + $0x8f0] sm:$0xff]
    %v384 = vld [vmem:[#allocation7 + $0x8f8] sm:$0xff]
    %v385 = vld [vmem:[#allocation8] sm:$0x77]
    %v386 = vld [vmem:[#allocation8 + $0x8] sm:$0x77]
    %v387 = vld [vmem:[#allocation8 + $0x10] sm:$0x77]
    %v391 = vperm.slane %v385, 0
    %v392 = vperm.slane %v385, 4
    %v393 = vperm.slane %v386, 0
    %v394 = vperm.slane %v386, 4
    %v395 = vperm.slane %v387, 0
    %v396 = vperm.slane %v387, 4
    %v403 = vperm.slane %v391, 0
    %v404 = vperm.slane %v392, 0
    %v405 = vperm.slane %v393, 0
    %v406 = vperm.slane %v394, 0
    %v407 = vperm.slane %v395, 0
    %v408 = vperm.slane %v396, 0
    %v697 = vunpack.c.l.b16 %v97
    %v698 = vunpack.c.h.b16 %v97
    %v699 = vunpack.c.l.b16 %v98
    %v700 = vunpack.c.h.b16 %v98
    %v701 = vunpack.c.l.b16 %v99
    %v702 = vunpack.c.h.b16 %v99
    %v703 = vunpack.c.l.b16 %v100
    %v704 = vunpack.c.h.b16 %v100
    %v705 = vunpack.c.l.b16 %v101
    %v706 = vunpack.c.h.b16 %v101
    %v707 = vunpack.c.l.b16 %v102
    %v708 = vunpack.c.h.b16 %v102
    %v709 = vunpack.c.l.b16 %v103
    %v710 = vunpack.c.h.b16 %v103
    %v711 = vunpack.c.l.b16 %v104
    %v712 = vunpack.c.h.b16 %v104
    %v713 = vunpack.c.l.b16 %v105
    %v714 = vunpack.c.h.b16 %v105
    %v715 = vunpack.c.l.b16 %v106
    %v716 = vunpack.c.h.b16 %v106
    %v717 = vunpack.c.l.b16 %v107
    %v718 = vunpack.c.h.b16 %v107
    %v719 = vunpack.c.l.b16 %v108
    %v720 = vunpack.c.h.b16 %v108
    %v721 = vunpack.c.l.b16 %v109
    %v722 = vunpack.c.h.b16 %v109
    %v723 = vunpack.c.l.b16 %v110
    %v724 = vunpack.c.h.b16 %v110
    %v725 = vunpack.c.l.b16 %v111
    %v726 = vunpack.c.h.b16 %v111
    %v727 = vunpack.c.l.b16 %v112
    %v728 = vunpack.c.h.b16 %v112
    %v729 = vunpack.c.l.b16 %v113
    %v730 = vunpack.c.h.b16 %v113
    %v731 = vunpack.c.l.b16 %v114
    %v732 = vunpack.c.h.b16 %v114
    %v733 = vunpack.c.l.b16 %v115
    %v734 = vunpack.c.h.b16 %v115
    %v735 = vunpack.c.l.b16 %v116
    %v736 = vunpack.c.h.b16 %v116
    %v737 = vunpack.c.l.b16 %v117
    %v738 = vunpack.c.h.b16 %v117
    %v739 = vunpack.c.l.b16 %v118
    %v740 = vunpack.c.h.b16 %v118
    %v741 = vunpack.c.l.b16 %v119
    %v742 = vunpack.c.h.b16 %v119
    %v743 = vunpack.c.l.b16 %v120
    %v744 = vunpack.c.h.b16 %v120
    %v745 = vunpack.c.l.b16 %v121
    %v746 = vunpack.c.h.b16 %v121
    %v747 = vunpack.c.l.b16 %v122
    %v748 = vunpack.c.h.b16 %v122
    %v749 = vunpack.c.l.b16 %v123
    %v750 = vunpack.c.h.b16 %v123
    %v751 = vunpack.c.l.b16 %v124
    %v752 = vunpack.c.h.b16 %v124
    %v753 = vunpack.c.l.b16 %v125
    %v754 = vunpack.c.h.b16 %v125
    %v755 = vunpack.c.l.b16 %v126
    %v756 = vunpack.c.h.b16 %v126
    %v757 = vunpack.c.l.b16 %v127
    %v758 = vunpack.c.h.b16 %v127
    %v759 = vunpack.c.l.b16 %v128
    %v760 = vunpack.c.h.b16 %v128
    %v761 = vunpack.c.l.b16 %v129
    %v762 = vunpack.c.h.b16 %v129
    %v763 = vunpack.c.l.b16 %v130
    %v764 = vunpack.c.h.b16 %v130
    %v765 = vunpack.c.l.b16 %v131
    %v766 = vunpack.c.h.b16 %v131
    %v767 = vunpack.c.l.b16 %v132
    %v768 = vunpack.c.h.b16 %v132
    %v769 = vunpack.c.l.b16 %v133
    %v770 = vunpack.c.h.b16 %v133
    %v771 = vunpack.c.l.b16 %v134
    %v772 = vunpack.c.h.b16 %v134
    %v773 = vunpack.c.l.b16 %v135
    %v774 = vunpack.c.h.b16 %v135
    %v775 = vunpack.c.l.b16 %v136
    %v776 = vunpack.c.h.b16 %v136
    %v777 = vunpack.c.l.b16 %v137
    %v778 = vunpack.c.h.b16 %v137
    %v779 = vunpack.c.l.b16 %v138
    %v780 = vunpack.c.h.b16 %v138
    %v781 = vunpack.c.l.b16 %v139
    %v782 = vunpack.c.h.b16 %v139
    %v783 = vunpack.c.l.b16 %v140
    %v784 = vunpack.c.h.b16 %v140
    %v785 = vunpack.c.l.b16 %v141
    %v786 = vunpack.c.h.b16 %v141
    %v787 = vunpack.c.l.b16 %v142
    %v788 = vunpack.c.h.b16 %v142
    %v789 = vunpack.c.l.b16 %v143
    %v790 = vunpack.c.h.b16 %v143
    %v791 = vunpack.c.l.b16 %v144
    %v792 = vunpack.c.h.b16 %v144
    %v793 = vunpack.c.l.b16 %v145
    %v794 = vunpack.c.h.b16 %v145
    %v795 = vunpack.c.l.b16 %v146
    %v796 = vunpack.c.h.b16 %v146
    %v797 = vunpack.c.l.b16 %v147
    %v798 = vunpack.c.h.b16 %v147
    %v799 = vunpack.c.l.b16 %v148
    %v800 = vunpack.c.h.b16 %v148
    %v801 = vunpack.c.l.b16 %v149
    %v802 = vunpack.c.h.b16 %v149
    %v803 = vunpack.c.l.b16 %v150
    %v804 = vunpack.c.h.b16 %v150
    %v805 = vunpack.c.l.b16 %v151
    %v806 = vunpack.c.h.b16 %v151
    %v807 = vunpack.c.l.b16 %v152
    %v808 = vunpack.c.h.b16 %v152
    %v809 = vunpack.c.l.b16 %v153
    %v810 = vunpack.c.h.b16 %v153
    %v811 = vunpack.c.l.b16 %v154
    %v812 = vunpack.c.h.b16 %v154
    %v813 = vunpack.c.l.b16 %v155
    %v814 = vunpack.c.h.b16 %v155
    %v815 = vunpack.c.l.b16 %v156
    %v816 = vunpack.c.h.b16 %v156
    %v817 = vunpack.c.l.b16 %v157
    %v818 = vunpack.c.h.b16 %v157
    %v819 = vunpack.c.l.b16 %v158
    %v820 = vunpack.c.h.b16 %v158
    %v821 = vunpack.c.l.b16 %v159
    %v822 = vunpack.c.h.b16 %v159
    %v823 = vunpack.c.l.b16 %v160
    %v824 = vunpack.c.h.b16 %v160
    %v825 = vunpack.c.l.b16 %v161
    %v826 = vunpack.c.h.b16 %v161
    %v827 = vunpack.c.l.b16 %v162
    %v828 = vunpack.c.h.b16 %v162
    %v829 = vunpack.c.l.b16 %v163
    %v830 = vunpack.c.h.b16 %v163
    %v831 = vunpack.c.l.b16 %v164
    %v832 = vunpack.c.h.b16 %v164
    %v833 = vunpack.c.l.b16 %v165
    %v834 = vunpack.c.h.b16 %v165
    %v835 = vunpack.c.l.b16 %v166
    %v836 = vunpack.c.h.b16 %v166
    %v837 = vunpack.c.l.b16 %v167
    %v838 = vunpack.c.h.b16 %v167
    %v839 = vunpack.c.l.b16 %v168
    %v840 = vunpack.c.h.b16 %v168
    %v841 = vunpack.c.l.b16 %v169
    %v842 = vunpack.c.h.b16 %v169
    %v843 = vunpack.c.l.b16 %v170
    %v844 = vunpack.c.h.b16 %v170
    %v845 = vunpack.c.l.b16 %v171
    %v846 = vunpack.c.h.b16 %v171
    %v847 = vunpack.c.l.b16 %v172
    %v848 = vunpack.c.h.b16 %v172
    %v849 = vunpack.c.l.b16 %v173
    %v850 = vunpack.c.h.b16 %v173
    %v851 = vunpack.c.l.b16 %v174
    %v852 = vunpack.c.h.b16 %v174
    %v853 = vunpack.c.l.b16 %v175
    %v854 = vunpack.c.h.b16 %v175
    %v855 = vunpack.c.l.b16 %v176
    %v856 = vunpack.c.h.b16 %v176
    %v857 = vunpack.c.l.b16 %v177
    %v858 = vunpack.c.h.b16 %v177
    %v859 = vunpack.c.l.b16 %v178
    %v860 = vunpack.c.h.b16 %v178
    %v861 = vunpack.c.l.b16 %v179
    %v862 = vunpack.c.h.b16 %v179
    %v863 = vunpack.c.l.b16 %v180
    %v864 = vunpack.c.h.b16 %v180
    %v865 = vunpack.c.l.b16 %v181
    %v866 = vunpack.c.h.b16 %v181
    %v867 = vunpack.c.l.b16 %v182
    %v868 = vunpack.c.h.b16 %v182
    %v869 = vunpack.c.l.b16 %v183
    %v870 = vunpack.c.h.b16 %v183
    %v871 = vunpack.c.l.b16 %v184
    %v872 = vunpack.c.h.b16 %v184
    %v873 = vunpack.c.l.b16 %v185
    %v874 = vunpack.c.h.b16 %v185
    %v875 = vunpack.c.l.b16 %v186
    %v876 = vunpack.c.h.b16 %v186
    %v877 = vunpack.c.l.b16 %v187
    %v878 = vunpack.c.h.b16 %v187
    %v879 = vunpack.c.l.b16 %v188
    %v880 = vunpack.c.h.b16 %v188
    %v881 = vunpack.c.l.b16 %v189
    %v882 = vunpack.c.h.b16 %v189
    %v883 = vunpack.c.l.b16 %v190
    %v884 = vunpack.c.h.b16 %v190
    %v885 = vunpack.c.l.b16 %v191
    %v886 = vunpack.c.h.b16 %v191
    %v887 = vunpack.c.l.b16 %v192
    %v888 = vunpack.c.h.b16 %v192
    %v889 = vunpack.c.l.b16 %v193
    %v890 = vunpack.c.h.b16 %v193
    %v891 = vunpack.c.l.b16 %v194
    %v892 = vunpack.c.h.b16 %v194
    %v893 = vunpack.c.l.b16 %v195
    %v894 = vunpack.c.h.b16 %v195
    %v895 = vunpack.c.l.b16 %v196
    %v896 = vunpack.c.h.b16 %v196
    %v897 = vunpack.c.l.b16 %v197
    %v898 = vunpack.c.h.b16 %v197
    %v899 = vunpack.c.l.b16 %v198
    %v900 = vunpack.c.h.b16 %v198
    %v901 = vunpack.c.l.b16 %v199
    %v902 = vunpack.c.h.b16 %v199
    %v903 = vunpack.c.l.b16 %v200
    %v904 = vunpack.c.h.b16 %v200
    %v905 = vunpack.c.l.b16 %v201
    %v906 = vunpack.c.h.b16 %v201
    %v907 = vunpack.c.l.b16 %v202
    %v908 = vunpack.c.h.b16 %v202
    %v909 = vunpack.c.l.b16 %v203
    %v910 = vunpack.c.h.b16 %v203
    %v911 = vunpack.c.l.b16 %v204
    %v912 = vunpack.c.h.b16 %v204
    %v913 = vunpack.c.l.b16 %v205
    %v914 = vunpack.c.h.b16 %v205
    %v915 = vunpack.c.l.b16 %v206
    %v916 = vunpack.c.h.b16 %v206
    %v917 = vunpack.c.l.b16 %v207
    %v918 = vunpack.c.h.b16 %v207
    %v919 = vunpack.c.l.b16 %v208
    %v920 = vunpack.c.h.b16 %v208
    %v921 = vunpack.c.l.b16 %v209
    %v922 = vunpack.c.h.b16 %v209
    %v923 = vunpack.c.l.b16 %v210
    %v924 = vunpack.c.h.b16 %v210
    %v925 = vunpack.c.l.b16 %v211
    %v926 = vunpack.c.h.b16 %v211
    %v927 = vunpack.c.l.b16 %v212
    %v928 = vunpack.c.h.b16 %v212
    %v929 = vunpack.c.l.b16 %v213
    %v930 = vunpack.c.h.b16 %v213
    %v931 = vunpack.c.l.b16 %v214
    %v932 = vunpack.c.h.b16 %v214
    %v933 = vunpack.c.l.b16 %v215
    %v934 = vunpack.c.h.b16 %v215
    %v935 = vunpack.c.l.b16 %v216
    %v936 = vunpack.c.h.b16 %v216
    %v937 = vunpack.c.l.b16 %v217
    %v938 = vunpack.c.h.b16 %v217
    %v939 = vunpack.c.l.b16 %v218
    %v940 = vunpack.c.h.b16 %v218
    %v941 = vunpack.c.l.b16 %v219
    %v942 = vunpack.c.h.b16 %v219
    %v943 = vunpack.c.l.b16 %v220
    %v944 = vunpack.c.h.b16 %v220
    %v945 = vunpack.c.l.b16 %v221
    %v946 = vunpack.c.h.b16 %v221
    %v947 = vunpack.c.l.b16 %v222
    %v948 = vunpack.c.h.b16 %v222
    %v949 = vunpack.c.l.b16 %v223
    %v950 = vunpack.c.h.b16 %v223
    %v951 = vunpack.c.l.b16 %v224
    %v952 = vunpack.c.h.b16 %v224
    %v953 = vunpack.c.l.b16 %v225
    %v954 = vunpack.c.h.b16 %v225
    %v955 = vunpack.c.l.b16 %v226
    %v956 = vunpack.c.h.b16 %v226
    %v957 = vunpack.c.l.b16 %v227
    %v958 = vunpack.c.h.b16 %v227
    %v959 = vunpack.c.l.b16 %v228
    %v960 = vunpack.c.h.b16 %v228
    %v961 = vunpack.c.l.b16 %v229
    %v962 = vunpack.c.h.b16 %v229
    %v963 = vunpack.c.l.b16 %v230
    %v964 = vunpack.c.h.b16 %v230
    %v965 = vunpack.c.l.b16 %v231
    %v966 = vunpack.c.h.b16 %v231
    %v967 = vunpack.c.l.b16 %v232
    %v968 = vunpack.c.h.b16 %v232
    %v969 = vunpack.c.l.b16 %v233
    %v970 = vunpack.c.h.b16 %v233
    %v971 = vunpack.c.l.b16 %v234
    %v972 = vunpack.c.h.b16 %v234
    %v973 = vunpack.c.l.b16 %v235
    %v974 = vunpack.c.h.b16 %v235
    %v975 = vunpack.c.l.b16 %v236
    %v976 = vunpack.c.h.b16 %v236
    %v977 = vunpack.c.l.b16 %v237
    %v978 = vunpack.c.h.b16 %v237
    %v979 = vunpack.c.l.b16 %v238
    %v980 = vunpack.c.h.b16 %v238
    %v981 = vunpack.c.l.b16 %v239
    %v982 = vunpack.c.h.b16 %v239
    %v983 = vunpack.c.l.b16 %v240
    %v984 = vunpack.c.h.b16 %v240
    %v985 = vunpack.c.l.b16 %v241
    %v986 = vunpack.c.h.b16 %v241
    %v987 = vunpack.c.l.b16 %v242
    %v988 = vunpack.c.h.b16 %v242
    %v989 = vunpack.c.l.b16 %v243
    %v990 = vunpack.c.h.b16 %v243
    %v991 = vunpack.c.l.b16 %v244
    %v992 = vunpack.c.h.b16 %v244
    %v993 = vunpack.c.l.b16 %v245
    %v994 = vunpack.c.h.b16 %v245
    %v995 = vunpack.c.l.b16 %v246
    %v996 = vunpack.c.h.b16 %v246
    %v997 = vunpack.c.l.b16 %v247
    %v998 = vunpack.c.h.b16 %v247
    %v999 = vunpack.c.l.b16 %v248
    %v1000 = vunpack.c.h.b16 %v248
    %v1001 = vunpack.c.l.b16 %v249
    %v1002 = vunpack.c.h.b16 %v249
    %v1003 = vunpack.c.l.b16 %v250
    %v1004 = vunpack.c.h.b16 %v250
    %v1005 = vunpack.c.l.b16 %v251
    %v1006 = vunpack.c.h.b16 %v251
    %v1007 = vunpack.c.l.b16 %v252
    %v1008 = vunpack.c.h.b16 %v252
    %v1009 = vunpack.c.l.b16 %v253
    %v1010 = vunpack.c.h.b16 %v253
    %v1011 = vunpack.c.l.b16 %v254
    %v1012 = vunpack.c.h.b16 %v254
    %v1013 = vunpack.c.l.b16 %v255
    %v1014 = vunpack.c.h.b16 %v255
    %v1015 = vunpack.c.l.b16 %v256
    %v1016 = vunpack.c.h.b16 %v256
    %v1017 = vunpack.c.l.b16 %v257
    %v1018 = vunpack.c.h.b16 %v257
    %v1019 = vunpack.c.l.b16 %v258
    %v1020 = vunpack.c.h.b16 %v258
    %v1021 = vunpack.c.l.b16 %v259
    %v1022 = vunpack.c.h.b16 %v259
    %v1023 = vunpack.c.l.b16 %v260
    %v1024 = vunpack.c.h.b16 %v260
    %v1025 = vunpack.c.l.b16 %v261
    %v1026 = vunpack.c.h.b16 %v261
    %v1027 = vunpack.c.l.b16 %v262
    %v1028 = vunpack.c.h.b16 %v262
    %v1029 = vunpack.c.l.b16 %v263
    %v1030 = vunpack.c.h.b16 %v263
    %v1031 = vunpack.c.l.b16 %v264
    %v1032 = vunpack.c.h.b16 %v264
    %v1033 = vunpack.c.l.b16 %v265
    %v1034 = vunpack.c.h.b16 %v265
    %v1035 = vunpack.c.l.b16 %v266
    %v1036 = vunpack.c.h.b16 %v266
    %v1037 = vunpack.c.l.b16 %v267
    %v1038 = vunpack.c.h.b16 %v267
    %v1039 = vunpack.c.l.b16 %v268
    %v1040 = vunpack.c.h.b16 %v268
    %v1041 = vunpack.c.l.b16 %v269
    %v1042 = vunpack.c.h.b16 %v269
    %v1043 = vunpack.c.l.b16 %v270
    %v1044 = vunpack.c.h.b16 %v270
    %v1045 = vunpack.c.l.b16 %v271
    %v1046 = vunpack.c.h.b16 %v271
    %v1047 = vunpack.c.l.b16 %v272
    %v1048 = vunpack.c.h.b16 %v272
    %v1049 = vunpack.c.l.b16 %v273
    %v1050 = vunpack.c.h.b16 %v273
    %v1051 = vunpack.c.l.b16 %v274
    %v1052 = vunpack.c.h.b16 %v274
    %v1053 = vunpack.c.l.b16 %v275
    %v1054 = vunpack.c.h.b16 %v275
    %v1055 = vunpack.c.l.b16 %v276
    %v1056 = vunpack.c.h.b16 %v276
    %v1057 = vunpack.c.l.b16 %v277
    %v1058 = vunpack.c.h.b16 %v277
    %v1059 = vunpack.c.l.b16 %v278
    %v1060 = vunpack.c.h.b16 %v278
    %v1061 = vunpack.c.l.b16 %v279
    %v1062 = vunpack.c.h.b16 %v279
    %v1063 = vunpack.c.l.b16 %v280
    %v1064 = vunpack.c.h.b16 %v280
    %v1065 = vunpack.c.l.b16 %v281
    %v1066 = vunpack.c.h.b16 %v281
    %v1067 = vunpack.c.l.b16 %v282
    %v1068 = vunpack.c.h.b16 %v282
    %v1069 = vunpack.c.l.b16 %v283
    %v1070 = vunpack.c.h.b16 %v283
    %v1071 = vunpack.c.l.b16 %v284
    %v1072 = vunpack.c.h.b16 %v284
    %v1073 = vunpack.c.l.b16 %v285
    %v1074 = vunpack.c.h.b16 %v285
    %v1075 = vunpack.c.l.b16 %v286
    %v1076 = vunpack.c.h.b16 %v286
    %v1077 = vunpack.c.l.b16 %v287
    %v1078 = vunpack.c.h.b16 %v287
    %v1079 = vunpack.c.l.b16 %v288
    %v1080 = vunpack.c.h.b16 %v288
    %v1081 = vunpack.c.l.b16 %v289
    %v1082 = vunpack.c.h.b16 %v289
    %v1083 = vunpack.c.l.b16 %v290
    %v1084 = vunpack.c.h.b16 %v290
    %v1085 = vunpack.c.l.b16 %v291
    %v1086 = vunpack.c.h.b16 %v291
    %v1087 = vunpack.c.l.b16 %v292
    %v1088 = vunpack.c.h.b16 %v292
    %v1089 = vunpack.c.l.b16 %v293
    %v1090 = vunpack.c.h.b16 %v293
    %v1091 = vunpack.c.l.b16 %v294
    %v1092 = vunpack.c.h.b16 %v294
    %v1093 = vunpack.c.l.b16 %v295
    %v1094 = vunpack.c.h.b16 %v295
    %v1095 = vunpack.c.l.b16 %v296
    %v1096 = vunpack.c.h.b16 %v296
    %v1097 = vunpack.c.l.b16 %v297
    %v1098 = vunpack.c.h.b16 %v297
    %v1099 = vunpack.c.l.b16 %v298
    %v1100 = vunpack.c.h.b16 %v298
    %v1101 = vunpack.c.l.b16 %v299
    %v1102 = vunpack.c.h.b16 %v299
    %v1103 = vunpack.c.l.b16 %v300
    %v1104 = vunpack.c.h.b16 %v300
    %v1105 = vunpack.c.l.b16 %v301
    %v1106 = vunpack.c.h.b16 %v301
    %v1107 = vunpack.c.l.b16 %v302
    %v1108 = vunpack.c.h.b16 %v302
    %v1109 = vunpack.c.l.b16 %v303
    %v1110 = vunpack.c.h.b16 %v303
    %v1111 = vunpack.c.l.b16 %v304
    %v1112 = vunpack.c.h.b16 %v304
    %v1113 = vunpack.c.l.b16 %v305
    %v1114 = vunpack.c.h.b16 %v305
    %v1115 = vunpack.c.l.b16 %v306
    %v1116 = vunpack.c.h.b16 %v306
    %v1117 = vunpack.c.l.b16 %v307
    %v1118 = vunpack.c.h.b16 %v307
    %v1119 = vunpack.c.l.b16 %v308
    %v1120 = vunpack.c.h.b16 %v308
    %v1121 = vunpack.c.l.b16 %v309
    %v1122 = vunpack.c.h.b16 %v309
    %v1123 = vunpack.c.l.b16 %v310
    %v1124 = vunpack.c.h.b16 %v310
    %v1125 = vunpack.c.l.b16 %v311
    %v1126 = vunpack.c.h.b16 %v311
    %v1127 = vunpack.c.l.b16 %v312
    %v1128 = vunpack.c.h.b16 %v312
    %v1129 = vunpack.c.l.b16 %v313
    %v1130 = vunpack.c.h.b16 %v313
    %v1131 = vunpack.c.l.b16 %v314
    %v1132 = vunpack.c.h.b16 %v314
    %v1133 = vunpack.c.l.b16 %v315
    %v1134 = vunpack.c.h.b16 %v315
    %v1135 = vunpack.c.l.b16 %v316
    %v1136 = vunpack.c.h.b16 %v316
    %v1137 = vunpack.c.l.b16 %v317
    %v1138 = vunpack.c.h.b16 %v317
    %v1139 = vunpack.c.l.b16 %v318
    %v1140 = vunpack.c.h.b16 %v318
    %v1141 = vunpack.c.l.b16 %v319
    %v1142 = vunpack.c.h.b16 %v319
    %v1143 = vunpack.c.l.b16 %v320
    %v1144 = vunpack.c.h.b16 %v320
    %v1145 = vunpack.c.l.b16 %v321
    %v1146 = vunpack.c.h.b16 %v321
    %v1147 = vunpack.c.l.b16 %v322
    %v1148 = vunpack.c.h.b16 %v322
    %v1149 = vunpack.c.l.b16 %v323
    %v1150 = vunpack.c.h.b16 %v323
    %v1151 = vunpack.c.l.b16 %v324
    %v1152 = vunpack.c.h.b16 %v324
    %v1153 = vunpack.c.l.b16 %v325
    %v1154 = vunpack.c.h.b16 %v325
    %v1155 = vunpack.c.l.b16 %v326
    %v1156 = vunpack.c.h.b16 %v326
    %v1157 = vunpack.c.l.b16 %v327
    %v1158 = vunpack.c.h.b16 %v327
    %v1159 = vunpack.c.l.b16 %v328
    %v1160 = vunpack.c.h.b16 %v328
    %v1161 = vunpack.c.l.b16 %v329
    %v1162 = vunpack.c.h.b16 %v329
    %v1163 = vunpack.c.l.b16 %v330
    %v1164 = vunpack.c.h.b16 %v330
    %v1165 = vunpack.c.l.b16 %v331
    %v1166 = vunpack.c.h.b16 %v331
    %v1167 = vunpack.c.l.b16 %v332
    %v1168 = vunpack.c.h.b16 %v332
    %v1169 = vunpack.c.l.b16 %v333
    %v1170 = vunpack.c.h.b16 %v333
    %v1171 = vunpack.c.l.b16 %v334
    %v1172 = vunpack.c.h.b16 %v334
    %v1173 = vunpack.c.l.b16 %v335
    %v1174 = vunpack.c.h.b16 %v335
    %v1175 = vunpack.c.l.b16 %v336
    %v1176 = vunpack.c.h.b16 %v336
    %v1177 = vunpack.c.l.b16 %v337
    %v1178 = vunpack.c.h.b16 %v337
    %v1179 = vunpack.c.l.b16 %v338
    %v1180 = vunpack.c.h.b16 %v338
    %v1181 = vunpack.c.l.b16 %v339
    %v1182 = vunpack.c.h.b16 %v339
    %v1183 = vunpack.c.l.b16 %v340
    %v1184 = vunpack.c.h.b16 %v340
    %v1185 = vunpack.c.l.b16 %v341
    %v1186 = vunpack.c.h.b16 %v341
    %v1187 = vunpack.c.l.b16 %v342
    %v1188 = vunpack.c.h.b16 %v342
    %v1189 = vunpack.c.l.b16 %v343
    %v1190 = vunpack.c.h.b16 %v343
    %v1191 = vunpack.c.l.b16 %v344
    %v1192 = vunpack.c.h.b16 %v344
    %v1193 = vunpack.c.l.b16 %v345
    %v1194 = vunpack.c.h.b16 %v345
    %v1195 = vunpack.c.l.b16 %v346
    %v1196 = vunpack.c.h.b16 %v346
    %v1197 = vunpack.c.l.b16 %v347
    %v1198 = vunpack.c.h.b16 %v347
    %v1199 = vunpack.c.l.b16 %v348
    %v1200 = vunpack.c.h.b16 %v348
    %v1201 = vunpack.c.l.b16 %v349
    %v1202 = vunpack.c.h.b16 %v349
    %v1203 = vunpack.c.l.b16 %v350
    %v1204 = vunpack.c.h.b16 %v350
    %v1205 = vunpack.c.l.b16 %v351
    %v1206 = vunpack.c.h.b16 %v351
    %v1207 = vunpack.c.l.b16 %v352
    %v1208 = vunpack.c.h.b16 %v352
    %v1209 = vunpack.c.l.b16 %v353
    %v1210 = vunpack.c.h.b16 %v353
    %v1211 = vunpack.c.l.b16 %v354
    %v1212 = vunpack.c.h.b16 %v354
    %v1213 = vunpack.c.l.b16 %v355
    %v1214 = vunpack.c.h.b16 %v355
    %v1215 = vunpack.c.l.b16 %v356
    %v1216 = vunpack.c.h.b16 %v356
    %v1217 = vunpack.c.l.b16 %v357
    %v1218 = vunpack.c.h.b16 %v357
    %v1219 = vunpack.c.l.b16 %v358
    %v1220 = vunpack.c.h.b16 %v358
    %v1221 = vunpack.c.l.b16 %v359
    %v1222 = vunpack.c.h.b16 %v359
    %v1223 = vunpack.c.l.b16 %v360
    %v1224 = vunpack.c.h.b16 %v360
    %v1225 = vunpack.c.l.b16 %v361
    %v1226 = vunpack.c.h.b16 %v361
    %v1227 = vunpack.c.l.b16 %v362
    %v1228 = vunpack.c.h.b16 %v362
    %v1229 = vunpack.c.l.b16 %v363
    %v1230 = vunpack.c.h.b16 %v363
    %v1231 = vunpack.c.l.b16 %v364
    %v1232 = vunpack.c.h.b16 %v364
    %v1233 = vunpack.c.l.b16 %v365
    %v1234 = vunpack.c.h.b16 %v365
    %v1235 = vunpack.c.l.b16 %v366
    %v1236 = vunpack.c.h.b16 %v366
    %v1237 = vunpack.c.l.b16 %v367
    %v1238 = vunpack.c.h.b16 %v367
    %v1239 = vunpack.c.l.b16 %v368
    %v1240 = vunpack.c.h.b16 %v368
    %v1241 = vunpack.c.l.b16 %v369
    %v1242 = vunpack.c.h.b16 %v369
    %v1243 = vunpack.c.l.b16 %v370
    %v1244 = vunpack.c.h.b16 %v370
    %v1245 = vunpack.c.l.b16 %v371
    %v1246 = vunpack.c.h.b16 %v371
    %v1247 = vunpack.c.l.b16 %v372
    %v1248 = vunpack.c.h.b16 %v372
    %v1249 = vunpack.c.l.b16 %v373
    %v1250 = vunpack.c.h.b16 %v373
    %v1251 = vunpack.c.l.b16 %v374
    %v1252 = vunpack.c.h.b16 %v374
    %v1253 = vunpack.c.l.b16 %v375
    %v1254 = vunpack.c.h.b16 %v375
    %v1255 = vunpack.c.l.b16 %v376
    %v1256 = vunpack.c.h.b16 %v376
    %v1257 = vunpack.c.l.b16 %v377
    %v1258 = vunpack.c.h.b16 %v377
    %v1259 = vunpack.c.l.b16 %v378
    %v1260 = vunpack.c.h.b16 %v378
    %v1261 = vunpack.c.l.b16 %v379
    %v1262 = vunpack.c.h.b16 %v379
    %v1263 = vunpack.c.l.b16 %v380
    %v1264 = vunpack.c.h.b16 %v380
    %v1265 = vunpack.c.l.b16 %v381
    %v1266 = vunpack.c.h.b16 %v381
    %v1267 = vunpack.c.l.b16 %v382
    %v1268 = vunpack.c.h.b16 %v382
    %v1269 = vunpack.c.l.b16 %v383
    %v1270 = vunpack.c.h.b16 %v383
    %v1271 = vunpack.c.l.b16 %v384
    %v1272 = vunpack.c.h.b16 %v384
    %v1273 = vpack.c.b16 %v703, %v697
    %v1274 = vpack.c.b16 %v704, %v698
    %v1275 = vpack.c.b16 %v705, %v699
    %v1276 = vpack.c.b16 %v706, %v700
    %v1277 = vpack.c.b16 %v707, %v701
    %v1278 = vpack.c.b16 %v708, %v702
    %v1279 = vpack.c.b16 %v715, %v709
    %v1280 = vpack.c.b16 %v716, %v710
    %v1281 = vpack.c.b16 %v717, %v711
    %v1282 = vpack.c.b16 %v718, %v712
    %v1283 = vpack.c.b16 %v719, %v713
    %v1284 = vpack.c.b16 %v720, %v714
    %v1285 = vpack.c.b16 %v727, %v721
    %v1286 = vpack.c.b16 %v728, %v722
    %v1287 = vpack.c.b16 %v729, %v723
    %v1288 = vpack.c.b16 %v730, %v724
    %v1289 = vpack.c.b16 %v731, %v725
    %v1290 = vpack.c.b16 %v732, %v726
    %v1291 = vpack.c.b16 %v739, %v733
    %v1292 = vpack.c.b16 %v740, %v734
    %v1293 = vpack.c.b16 %v741, %v735
    %v1294 = vpack.c.b16 %v742, %v736
    %v1295 = vpack.c.b16 %v743, %v737
    %v1296 = vpack.c.b16 %v744, %v738
    %v1297 = vpack.c.b16 %v751, %v745
    %v1298 = vpack.c.b16 %v752, %v746
    %v1299 = vpack.c.b16 %v753, %v747
    %v1300 = vpack.c.b16 %v754, %v748
    %v1301 = vpack.c.b16 %v755, %v749
    %v1302 = vpack.c.b16 %v756, %v750
    %v1303 = vpack.c.b16 %v763, %v757
    %v1304 = vpack.c.b16 %v764, %v758
    %v1305 = vpack.c.b16 %v765, %v759
    %v1306 = vpack.c.b16 %v766, %v760
    %v1307 = vpack.c.b16 %v767, %v761
    %v1308 = vpack.c.b16 %v768, %v762
    %v1309 = vpack.c.b16 %v775, %v769
    %v1310 = vpack.c.b16 %v776, %v770
    %v1311 = vpack.c.b16 %v777, %v771
    %v1312 = vpack.c.b16 %v778, %v772
    %v1313 = vpack.c.b16 %v779, %v773
    %v1314 = vpack.c.b16 %v780, %v774
    %v1315 = vpack.c.b16 %v787, %v781
    %v1316 = vpack.c.b16 %v788, %v782
    %v1317 = vpack.c.b16 %v789, %v783
    %v1318 = vpack.c.b16 %v790, %v784
    %v1319 = vpack.c.b16 %v791, %v785
    %v1320 = vpack.c.b16 %v792, %v786
    %v1321 = vpack.c.b16 %v799, %v793
    %v1322 = vpack.c.b16 %v800, %v794
    %v1323 = vpack.c.b16 %v801, %v795
    %v1324 = vpack.c.b16 %v802, %v796
    %v1325 = vpack.c.b16 %v803, %v797
    %v1326 = vpack.c.b16 %v804, %v798
    %v1327 = vpack.c.b16 %v811, %v805
    %v1328 = vpack.c.b16 %v812, %v806
    %v1329 = vpack.c.b16 %v813, %v807
    %v1330 = vpack.c.b16 %v814, %v808
    %v1331 = vpack.c.b16 %v815, %v809
    %v1332 = vpack.c.b16 %v816, %v810
    %v1333 = vpack.c.b16 %v823, %v817
    %v1334 = vpack.c.b16 %v824, %v818
    %v1335 = vpack.c.b16 %v825, %v819
    %v1336 = vpack.c.b16 %v826, %v820
    %v1337 = vpack.c.b16 %v827, %v821
    %v1338 = vpack.c.b16 %v828, %v822
    %v1339 = vpack.c.b16 %v835, %v829
    %v1340 = vpack.c.b16 %v836, %v830
    %v1341 = vpack.c.b16 %v837, %v831
    %v1342 = vpack.c.b16 %v838, %v832
    %v1343 = vpack.c.b16 %v839, %v833
    %v1344 = vpack.c.b16 %v840, %v834
    %v1345 = vpack.c.b16 %v847, %v841
    %v1346 = vpack.c.b16 %v848, %v842
    %v1347 = vpack.c.b16 %v849, %v843
    %v1348 = vpack.c.b16 %v850, %v844
    %v1349 = vpack.c.b16 %v851, %v845
    %v1350 = vpack.c.b16 %v852, %v846
    %v1351 = vpack.c.b16 %v859, %v853
    %v1352 = vpack.c.b16 %v860, %v854
    %v1353 = vpack.c.b16 %v861, %v855
    %v1354 = vpack.c.b16 %v862, %v856
    %v1355 = vpack.c.b16 %v863, %v857
    %v1356 = vpack.c.b16 %v864, %v858
    %v1357 = vpack.c.b16 %v871, %v865
    %v1358 = vpack.c.b16 %v872, %v866
    %v1359 = vpack.c.b16 %v873, %v867
    %v1360 = vpack.c.b16 %v874, %v868
    %v1361 = vpack.c.b16 %v875, %v869
    %v1362 = vpack.c.b16 %v876, %v870
    %v1363 = vpack.c.b16 %v883, %v877
    %v1364 = vpack.c.b16 %v884, %v878
    %v1365 = vpack.c.b16 %v885, %v879
    %v1366 = vpack.c.b16 %v886, %v880
    %v1367 = vpack.c.b16 %v887, %v881
    %v1368 = vpack.c.b16 %v888, %v882
    %v1369 = vpack.c.b16 %v895, %v889
    %v1370 = vpack.c.b16 %v896, %v890
    %v1371 = vpack.c.b16 %v897, %v891
    %v1372 = vpack.c.b16 %v898, %v892
    %v1373 = vpack.c.b16 %v899, %v893
    %v1374 = vpack.c.b16 %v900, %v894
    %v1375 = vpack.c.b16 %v907, %v901
    %v1376 = vpack.c.b16 %v908, %v902
    %v1377 = vpack.c.b16 %v909, %v903
    %v1378 = vpack.c.b16 %v910, %v904
    %v1379 = vpack.c.b16 %v911, %v905
    %v1380 = vpack.c.b16 %v912, %v906
    %v1381 = vpack.c.b16 %v919, %v913
    %v1382 = vpack.c.b16 %v920, %v914
    %v1383 = vpack.c.b16 %v921, %v915
    %v1384 = vpack.c.b16 %v922, %v916
    %v1385 = vpack.c.b16 %v923, %v917
    %v1386 = vpack.c.b16 %v924, %v918
    %v1387 = vpack.c.b16 %v931, %v925
    %v1388 = vpack.c.b16 %v932, %v926
    %v1389 = vpack.c.b16 %v933, %v927
    %v1390 = vpack.c.b16 %v934, %v928
    %v1391 = vpack.c.b16 %v935, %v929
    %v1392 = vpack.c.b16 %v936, %v930
    %v1393 = vpack.c.b16 %v943, %v937
    %v1394 = vpack.c.b16 %v944, %v938
    %v1395 = vpack.c.b16 %v945, %v939
    %v1396 = vpack.c.b16 %v946, %v940
    %v1397 = vpack.c.b16 %v947, %v941
    %v1398 = vpack.c.b16 %v948, %v942
    %v1399 = vpack.c.b16 %v955, %v949
    %v1400 = vpack.c.b16 %v956, %v950
    %v1401 = vpack.c.b16 %v957, %v951
    %v1402 = vpack.c.b16 %v958, %v952
    %v1403 = vpack.c.b16 %v959, %v953
    %v1404 = vpack.c.b16 %v960, %v954
    %v1405 = vpack.c.b16 %v967, %v961
    %v1406 = vpack.c.b16 %v968, %v962
    %v1407 = vpack.c.b16 %v969, %v963
    %v1408 = vpack.c.b16 %v970, %v964
    %v1409 = vpack.c.b16 %v971, %v965
    %v1410 = vpack.c.b16 %v972, %v966
    %v1411 = vpack.c.b16 %v979, %v973
    %v1412 = vpack.c.b16 %v980, %v974
    %v1413 = vpack.c.b16 %v981, %v975
    %v1414 = vpack.c.b16 %v982, %v976
    %v1415 = vpack.c.b16 %v983, %v977
    %v1416 = vpack.c.b16 %v984, %v978
    %v1417 = vpack.c.b16 %v991, %v985
    %v1418 = vpack.c.b16 %v992, %v986
    %v1419 = vpack.c.b16 %v993, %v987
    %v1420 = vpack.c.b16 %v994, %v988
    %v1421 = vpack.c.b16 %v995, %v989
    %v1422 = vpack.c.b16 %v996, %v990
    %v1423 = vpack.c.b16 %v1003, %v997
    %v1424 = vpack.c.b16 %v1004, %v998
    %v1425 = vpack.c.b16 %v1005, %v999
    %v1426 = vpack.c.b16 %v1006, %v1000
    %v1427 = vpack.c.b16 %v1007, %v1001
    %v1428 = vpack.c.b16 %v1008, %v1002
    %v1429 = vpack.c.b16 %v1015, %v1009
    %v1430 = vpack.c.b16 %v1016, %v1010
    %v1431 = vpack.c.b16 %v1017, %v1011
    %v1432 = vpack.c.b16 %v1018, %v1012
    %v1433 = vpack.c.b16 %v1019, %v1013
    %v1434 = vpack.c.b16 %v1020, %v1014
    %v1435 = vpack.c.b16 %v1027, %v1021
    %v1436 = vpack.c.b16 %v1028, %v1022
    %v1437 = vpack.c.b16 %v1029, %v1023
    %v1438 = vpack.c.b16 %v1030, %v1024
    %v1439 = vpack.c.b16 %v1031, %v1025
    %v1440 = vpack.c.b16 %v1032, %v1026
    %v1441 = vpack.c.b16 %v1039, %v1033
    %v1442 = vpack.c.b16 %v1040, %v1034
    %v1443 = vpack.c.b16 %v1041, %v1035
    %v1444 = vpack.c.b16 %v1042, %v1036
    %v1445 = vpack.c.b16 %v1043, %v1037
    %v1446 = vpack.c.b16 %v1044, %v1038
    %v1447 = vpack.c.b16 %v1051, %v1045
    %v1448 = vpack.c.b16 %v1052, %v1046
    %v1449 = vpack.c.b16 %v1053, %v1047
    %v1450 = vpack.c.b16 %v1054, %v1048
    %v1451 = vpack.c.b16 %v1055, %v1049
    %v1452 = vpack.c.b16 %v1056, %v1050
    %v1453 = vpack.c.b16 %v1063, %v1057
    %v1454 = vpack.c.b16 %v1064, %v1058
    %v1455 = vpack.c.b16 %v1065, %v1059
    %v1456 = vpack.c.b16 %v1066, %v1060
    %v1457 = vpack.c.b16 %v1067, %v1061
    %v1458 = vpack.c.b16 %v1068, %v1062
    %v1459 = vpack.c.b16 %v1075, %v1069
    %v1460 = vpack.c.b16 %v1076, %v1070
    %v1461 = vpack.c.b16 %v1077, %v1071
    %v1462 = vpack.c.b16 %v1078, %v1072
    %v1463 = vpack.c.b16 %v1079, %v1073
    %v1464 = vpack.c.b16 %v1080, %v1074
    %v1465 = vpack.c.b16 %v1087, %v1081
    %v1466 = vpack.c.b16 %v1088, %v1082
    %v1467 = vpack.c.b16 %v1089, %v1083
    %v1468 = vpack.c.b16 %v1090, %v1084
    %v1469 = vpack.c.b16 %v1091, %v1085
    %v1470 = vpack.c.b16 %v1092, %v1086
    %v1471 = vpack.c.b16 %v1099, %v1093
    %v1472 = vpack.c.b16 %v1100, %v1094
    %v1473 = vpack.c.b16 %v1101, %v1095
    %v1474 = vpack.c.b16 %v1102, %v1096
    %v1475 = vpack.c.b16 %v1103, %v1097
    %v1476 = vpack.c.b16 %v1104, %v1098
    %v1477 = vpack.c.b16 %v1111, %v1105
    %v1478 = vpack.c.b16 %v1112, %v1106
    %v1479 = vpack.c.b16 %v1113, %v1107
    %v1480 = vpack.c.b16 %v1114, %v1108
    %v1481 = vpack.c.b16 %v1115, %v1109
    %v1482 = vpack.c.b16 %v1116, %v1110
    %v1483 = vpack.c.b16 %v1123, %v1117
    %v1484 = vpack.c.b16 %v1124, %v1118
    %v1485 = vpack.c.b16 %v1125, %v1119
    %v1486 = vpack.c.b16 %v1126, %v1120
    %v1487 = vpack.c.b16 %v1127, %v1121
    %v1488 = vpack.c.b16 %v1128, %v1122
    %v1489 = vpack.c.b16 %v1135, %v1129
    %v1490 = vpack.c.b16 %v1136, %v1130
    %v1491 = vpack.c.b16 %v1137, %v1131
    %v1492 = vpack.c.b16 %v1138, %v1132
    %v1493 = vpack.c.b16 %v1139, %v1133
    %v1494 = vpack.c.b16 %v1140, %v1134
    %v1495 = vpack.c.b16 %v1147, %v1141
    %v1496 = vpack.c.b16 %v1148, %v1142
    %v1497 = vpack.c.b16 %v1149, %v1143
    %v1498 = vpack.c.b16 %v1150, %v1144
    %v1499 = vpack.c.b16 %v1151, %v1145
    %v1500 = vpack.c.b16 %v1152, %v1146
    %v1501 = vpack.c.b16 %v1159, %v1153
    %v1502 = vpack.c.b16 %v1160, %v1154
    %v1503 = vpack.c.b16 %v1161, %v1155
    %v1504 = vpack.c.b16 %v1162, %v1156
    %v1505 = vpack.c.b16 %v1163, %v1157
    %v1506 = vpack.c.b16 %v1164, %v1158
    %v1507 = vpack.c.b16 %v1171, %v1165
    %v1508 = vpack.c.b16 %v1172, %v1166
    %v1509 = vpack.c.b16 %v1173, %v1167
    %v1510 = vpack.c.b16 %v1174, %v1168
    %v1511 = vpack.c.b16 %v1175, %v1169
    %v1512 = vpack.c.b16 %v1176, %v1170
    %v1513 = vpack.c.b16 %v1183, %v1177
    %v1514 = vpack.c.b16 %v1184, %v1178
    %v1515 = vpack.c.b16 %v1185, %v1179
    %v1516 = vpack.c.b16 %v1186, %v1180
    %v1517 = vpack.c.b16 %v1187, %v1181
    %v1518 = vpack.c.b16 %v1188, %v1182
    %v1519 = vpack.c.b16 %v1195, %v1189
    %v1520 = vpack.c.b16 %v1196, %v1190
    %v1521 = vpack.c.b16 %v1197, %v1191
    %v1522 = vpack.c.b16 %v1198, %v1192
    %v1523 = vpack.c.b16 %v1199, %v1193
    %v1524 = vpack.c.b16 %v1200, %v1194
    %v1525 = vpack.c.b16 %v1207, %v1201
    %v1526 = vpack.c.b16 %v1208, %v1202
    %v1527 = vpack.c.b16 %v1209, %v1203
    %v1528 = vpack.c.b16 %v1210, %v1204
    %v1529 = vpack.c.b16 %v1211, %v1205
    %v1530 = vpack.c.b16 %v1212, %v1206
    %v1531 = vpack.c.b16 %v1219, %v1213
    %v1532 = vpack.c.b16 %v1220, %v1214
    %v1533 = vpack.c.b16 %v1221, %v1215
    %v1534 = vpack.c.b16 %v1222, %v1216
    %v1535 = vpack.c.b16 %v1223, %v1217
    %v1536 = vpack.c.b16 %v1224, %v1218
    %v1537 = vpack.c.b16 %v1231, %v1225
    %v1538 = vpack.c.b16 %v1232, %v1226
    %v1539 = vpack.c.b16 %v1233, %v1227
    %v1540 = vpack.c.b16 %v1234, %v1228
    %v1541 = vpack.c.b16 %v1235, %v1229
    %v1542 = vpack.c.b16 %v1236, %v1230
    %v1543 = vpack.c.b16 %v1243, %v1237
    %v1544 = vpack.c.b16 %v1244, %v1238
    %v1545 = vpack.c.b16 %v1245, %v1239
    %v1546 = vpack.c.b16 %v1246, %v1240
    %v1547 = vpack.c.b16 %v1247, %v1241
    %v1548 = vpack.c.b16 %v1248, %v1242
    %v1549 = vpack.c.b16 %v1255, %v1249
    %v1550 = vpack.c.b16 %v1256, %v1250
    %v1551 = vpack.c.b16 %v1257, %v1251
    %v1552 = vpack.c.b16 %v1258, %v1252
    %v1553 = vpack.c.b16 %v1259, %v1253
    %v1554 = vpack.c.b16 %v1260, %v1254
    %v1555 = vpack.c.b16 %v1267, %v1261
    %v1556 = vpack.c.b16 %v1268, %v1262
    %v1557 = vpack.c.b16 %v1269, %v1263
    %v1558 = vpack.c.b16 %v1270, %v1264
    %v1559 = vpack.c.b16 %v1271, %v1265
    %v1560 = vpack.c.b16 %v1272, %v1266
    %1849 = vmatpush.bf16.msra.mxu0 %v1315
    %1850 = vmatpush.bf16.msra.mxu0 %v1309
    %1851 = vmatpush.bf16.msra.mxu0 %v1303
    %1852 = vmatpush.bf16.msra.mxu0 %v1297
    %1853 = vmatpush.bf16.msra.mxu0 %v1291
    %1854 = vmatpush.bf16.msra.mxu0 %v1285
    %1855 = vmatpush.bf16.msra.mxu0 %v1279
    %1856 = vmatpush.bf16.msra.mxu0 %v1273
    %1857 = vmatmul.bf16.gmra.mxu0 %v91
    %v1858 = vpop.f32.mrf.mxu0
    %v1859 = vadd.f32 %v403, %v1858
    %v1860 = vpop.f32.mrf.mxu0
    %v1861 = vadd.f32 %v403, %v1860
    %1862 = vdwg.mxu0
    %1863 = vmatpush.bf16.msra.mxu0 %v1363
    %1864 = vmatpush.bf16.msra.mxu0 %v1357
    %1865 = vmatpush.bf16.msra.mxu0 %v1351
    %1866 = vmatpush.bf16.msra.mxu0 %v1345
    %1867 = vmatpush.bf16.msra.mxu0 %v1339
    %1868 = vmatpush.bf16.msra.mxu0 %v1333
    %1869 = vmatpush.bf16.msra.mxu0 %v1327
    %1870 = vmatpush.bf16.msra.mxu0 %v1321
    %1871 = vmatmul.bf16.gmra.mxu0 %v92
    %v1872 = vpop.f32.mrf.mxu0
    %v1873 = vadd.f32 %v1859, %v1872
    %v1874 = vpop.f32.mrf.mxu0
    %v1875 = vadd.f32 %v1861, %v1874
    %1876 = vdwg.mxu0
    %1877 = vmatpush.bf16.msra.mxu0 %v1411
    %1878 = vmatpush.bf16.msra.mxu0 %v1405
    %1879 = vmatpush.bf16.msra.mxu0 %v1399
    %1880 = vmatpush.bf16.msra.mxu0 %v1393
    %1881 = vmatpush.bf16.msra.mxu0 %v1387
    %1882 = vmatpush.bf16.msra.mxu0 %v1381
    %1883 = vmatpush.bf16.msra.mxu0 %v1375
    %1884 = vmatpush.bf16.msra.mxu0 %v1369
    %1885 = vmatmul.bf16.gmra.mxu0 %v93
    %v1886 = vpop.f32.mrf.mxu0
    %v1887 = vadd.f32 %v1873, %v1886
    %v1888 = vpop.f32.mrf.mxu0
    %v1889 = vadd.f32 %v1875, %v1888
    %1890 = vdwg.mxu0
    %1891 = vmatpush.bf16.msra.mxu0 %v1459
    %1892 = vmatpush.bf16.msra.mxu0 %v1453
    %1893 = vmatpush.bf16.msra.mxu0 %v1447
    %1894 = vmatpush.bf16.msra.mxu0 %v1441
    %1895 = vmatpush.bf16.msra.mxu0 %v1435
    %1896 = vmatpush.bf16.msra.mxu0 %v1429
    %1897 = vmatpush.bf16.msra.mxu0 %v1423
    %1898 = vmatpush.bf16.msra.mxu0 %v1417
    %1899 = vmatmul.bf16.gmra.mxu0 %v94
    %v1900 = vpop.f32.mrf.mxu0
    %v1901 = vadd.f32 %v1887, %v1900
    %v1902 = vpop.f32.mrf.mxu0
    %v1903 = vadd.f32 %v1889, %v1902
    %1904 = vdwg.mxu0
    %1905 = vmatpush.bf16.msra.mxu0 %v1507
    %1906 = vmatpush.bf16.msra.mxu0 %v1501
    %1907 = vmatpush.bf16.msra.mxu0 %v1495
    %1908 = vmatpush.bf16.msra.mxu0 %v1489
    %1909 = vmatpush.bf16.msra.mxu0 %v1483
    %1910 = vmatpush.bf16.msra.mxu0 %v1477
    %1911 = vmatpush.bf16.msra.mxu0 %v1471
    %1912 = vmatpush.bf16.msra.mxu0 %v1465
    %1913 = vmatmul.bf16.gmra.mxu0 %v95
    %v1914 = vpop.f32.mrf.mxu0
    %v1915 = vadd.f32 %v1901, %v1914
    %v1916 = vpop.f32.mrf.mxu0
    %v1917 = vadd.f32 %v1903, %v1916
    %1918 = vdwg.mxu0
    %1919 = vmatpush.bf16.msra.mxu0 %v1555
    %1920 = vmatpush.bf16.msra.mxu0 %v1549
    %1921 = vmatpush.bf16.msra.mxu0 %v1543
    %1922 = vmatpush.bf16.msra.mxu0 %v1537
    %1923 = vmatpush.bf16.msra.mxu0 %v1531
    %1924 = vmatpush.bf16.msra.mxu0 %v1525
    %1925 = vmatpush.bf16.msra.mxu0 %v1519
    %1926 = vmatpush.bf16.msra.mxu0 %v1513
    %1927 = vmatmul.bf16.gmra.mxu0 %v96
    %v1928 = vpop.f32.mrf.mxu0
    %v1929 = vadd.f32 %v1915, %v1928
    %v1930 = vpop.f32.mrf.mxu0
    %v1931 = vadd.f32 %v1917, %v1930
    %1932 = vdwg.mxu0
    %1933 = vmatpush.bf16.msra.mxu0 %v1316
    %1934 = vmatpush.bf16.msra.mxu0 %v1310
    %1935 = vmatpush.bf16.msra.mxu0 %v1304
    %1936 = vmatpush.bf16.msra.mxu0 %v1298
    %1937 = vmatpush.bf16.msra.mxu0 %v1292
    %1938 = vmatpush.bf16.msra.mxu0 %v1286
    %1939 = vmatpush.bf16.msra.mxu0 %v1280
    %1940 = vmatpush.bf16.msra.mxu0 %v1274
    %1941 = vmatmul.bf16.gmra.mxu0 %v91
    %v1942 = vpop.f32.mrf.mxu0
    %v1943 = vadd.f32 %v404, %v1942
    %v1944 = vpop.f32.mrf.mxu0
    %v1945 = vadd.f32 %v404, %v1944
    %1946 = vdwg.mxu0
    %1947 = vmatpush.bf16.msra.mxu0 %v1364
    %1948 = vmatpush.bf16.msra.mxu0 %v1358
    %1949 = vmatpush.bf16.msra.mxu0 %v1352
    %1950 = vmatpush.bf16.msra.mxu0 %v1346
    %1951 = vmatpush.bf16.msra.mxu0 %v1340
    %1952 = vmatpush.bf16.msra.mxu0 %v1334
    %1953 = vmatpush.bf16.msra.mxu0 %v1328
    %1954 = vmatpush.bf16.msra.mxu0 %v1322
    %1955 = vmatmul.bf16.gmra.mxu0 %v92
    %v1956 = vpop.f32.mrf.mxu0
    %v1957 = vadd.f32 %v1943, %v1956
    %v1958 = vpop.f32.mrf.mxu0
    %v1959 = vadd.f32 %v1945, %v1958
    %1960 = vdwg.mxu0
    %1961 = vmatpush.bf16.msra.mxu0 %v1412
    %1962 = vmatpush.bf16.msra.mxu0 %v1406
    %1963 = vmatpush.bf16.msra.mxu0 %v1400
    %1964 = vmatpush.bf16.msra.mxu0 %v1394
    %1965 = vmatpush.bf16.msra.mxu0 %v1388
    %1966 = vmatpush.bf16.msra.mxu0 %v1382
    %1967 = vmatpush.bf16.msra.mxu0 %v1376
    %1968 = vmatpush.bf16.msra.mxu0 %v1370
    %1969 = vmatmul.bf16.gmra.mxu0 %v93
    %v1970 = vpop.f32.mrf.mxu0
    %v1971 = vadd.f32 %v1957, %v1970
    %v1972 = vpop.f32.mrf.mxu0
    %v1973 = vadd.f32 %v1959, %v1972
    %1974 = vdwg.mxu0
    %1975 = vmatpush.bf16.msra.mxu0 %v1460
    %1976 = vmatpush.bf16.msra.mxu0 %v1454
    %1977 = vmatpush.bf16.msra.mxu0 %v1448
    %1978 = vmatpush.bf16.msra.mxu0 %v1442
    %1979 = vmatpush.bf16.msra.mxu0 %v1436
    %1980 = vmatpush.bf16.msra.mxu0 %v1430
    %1981 = vmatpush.bf16.msra.mxu0 %v1424
    %1982 = vmatpush.bf16.msra.mxu0 %v1418
    %1983 = vmatmul.bf16.gmra.mxu0 %v94
    %v1984 = vpop.f32.mrf.mxu0
    %v1985 = vadd.f32 %v1971, %v1984
    %v1986 = vpop.f32.mrf.mxu0
    %v1987 = vadd.f32 %v1973, %v1986
    %1988 = vdwg.mxu0
    %1989 = vmatpush.bf16.msra.mxu0 %v1508
    %1990 = vmatpush.bf16.msra.mxu0 %v1502
    %1991 = vmatpush.bf16.msra.mxu0 %v1496
    %1992 = vmatpush.bf16.msra.mxu0 %v1490
    %1993 = vmatpush.bf16.msra.mxu0 %v1484
    %1994 = vmatpush.bf16.msra.mxu0 %v1478
    %1995 = vmatpush.bf16.msra.mxu0 %v1472
    %1996 = vmatpush.bf16.msra.mxu0 %v1466
    %1997 = vmatmul.bf16.gmra.mxu0 %v95
    %v1998 = vpop.f32.mrf.mxu0
    %v1999 = vadd.f32 %v1985, %v1998
    %v2000 = vpop.f32.mrf.mxu0
    %v2001 = vadd.f32 %v1987, %v2000
    %2002 = vdwg.mxu0
    %2003 = vmatpush.bf16.msra.mxu0 %v1556
    %2004 = vmatpush.bf16.msra.mxu0 %v1550
    %2005 = vmatpush.bf16.msra.mxu0 %v1544
    %2006 = vmatpush.bf16.msra.mxu0 %v1538
    %2007 = vmatpush.bf16.msra.mxu0 %v1532
    %2008 = vmatpush.bf16.msra.mxu0 %v1526
    %2009 = vmatpush.bf16.msra.mxu0 %v1520
    %2010 = vmatpush.bf16.msra.mxu0 %v1514
    %2011 = vmatmul.bf16.gmra.mxu0 %v96
    %v2012 = vpop.f32.mrf.mxu0
    %v2013 = vadd.f32 %v1999, %v2012
    %v2014 = vpop.f32.mrf.mxu0
    %v2015 = vadd.f32 %v2001, %v2014
    %2016 = vdwg.mxu0
    %2017 = vmatpush.bf16.msra.mxu0 %v1317
    %2018 = vmatpush.bf16.msra.mxu0 %v1311
    %2019 = vmatpush.bf16.msra.mxu0 %v1305
    %2020 = vmatpush.bf16.msra.mxu0 %v1299
    %2021 = vmatpush.bf16.msra.mxu0 %v1293
    %2022 = vmatpush.bf16.msra.mxu0 %v1287
    %2023 = vmatpush.bf16.msra.mxu0 %v1281
    %2024 = vmatpush.bf16.msra.mxu0 %v1275
    %2025 = vmatmul.bf16.gmra.mxu0 %v91
    %v2026 = vpop.f32.mrf.mxu0
    %v2027 = vadd.f32 %v405, %v2026
    %v2028 = vpop.f32.mrf.mxu0
    %v2029 = vadd.f32 %v405, %v2028
    %2030 = vdwg.mxu0
    %2031 = vmatpush.bf16.msra.mxu0 %v1365
    %2032 = vmatpush.bf16.msra.mxu0 %v1359
    %2033 = vmatpush.bf16.msra.mxu0 %v1353
    %2034 = vmatpush.bf16.msra.mxu0 %v1347
    %2035 = vmatpush.bf16.msra.mxu0 %v1341
    %2036 = vmatpush.bf16.msra.mxu0 %v1335
    %2037 = vmatpush.bf16.msra.mxu0 %v1329
    %2038 = vmatpush.bf16.msra.mxu0 %v1323
    %2039 = vmatmul.bf16.gmra.mxu0 %v92
    %v2040 = vpop.f32.mrf.mxu0
    %v2041 = vadd.f32 %v2027, %v2040
    %v2042 = vpop.f32.mrf.mxu0
    %v2043 = vadd.f32 %v2029, %v2042
    %2044 = vdwg.mxu0
    %2045 = vmatpush.bf16.msra.mxu0 %v1413
    %2046 = vmatpush.bf16.msra.mxu0 %v1407
    %2047 = vmatpush.bf16.msra.mxu0 %v1401
    %2048 = vmatpush.bf16.msra.mxu0 %v1395
    %2049 = vmatpush.bf16.msra.mxu0 %v1389
    %2050 = vmatpush.bf16.msra.mxu0 %v1383
    %2051 = vmatpush.bf16.msra.mxu0 %v1377
    %2052 = vmatpush.bf16.msra.mxu0 %v1371
    %2053 = vmatmul.bf16.gmra.mxu0 %v93
    %v2054 = vpop.f32.mrf.mxu0
    %v2055 = vadd.f32 %v2041, %v2054
    %v2056 = vpop.f32.mrf.mxu0
    %v2057 = vadd.f32 %v2043, %v2056
    %2058 = vdwg.mxu0
    %2059 = vmatpush.bf16.msra.mxu0 %v1461
    %2060 = vmatpush.bf16.msra.mxu0 %v1455
    %2061 = vmatpush.bf16.msra.mxu0 %v1449
    %2062 = vmatpush.bf16.msra.mxu0 %v1443
    %2063 = vmatpush.bf16.msra.mxu0 %v1437
    %2064 = vmatpush.bf16.msra.mxu0 %v1431
    %2065 = vmatpush.bf16.msra.mxu0 %v1425
    %2066 = vmatpush.bf16.msra.mxu0 %v1419
    %2067 = vmatmul.bf16.gmra.mxu0 %v94
    %v2068 = vpop.f32.mrf.mxu0
    %v2069 = vadd.f32 %v2055, %v2068
    %v2070 = vpop.f32.mrf.mxu0
    %v2071 = vadd.f32 %v2057, %v2070
    %2072 = vdwg.mxu0
    %2073 = vmatpush.bf16.msra.mxu0 %v1509
    %2074 = vmatpush.bf16.msra.mxu0 %v1503
    %2075 = vmatpush.bf16.msra.mxu0 %v1497
    %2076 = vmatpush.bf16.msra.mxu0 %v1491
    %2077 = vmatpush.bf16.msra.mxu0 %v1485
    %2078 = vmatpush.bf16.msra.mxu0 %v1479
    %2079 = vmatpush.bf16.msra.mxu0 %v1473
    %2080 = vmatpush.bf16.msra.mxu0 %v1467
    %2081 = vmatmul.bf16.gmra.mxu0 %v95
    %v2082 = vpop.f32.mrf.mxu0
    %v2083 = vadd.f32 %v2069, %v2082
    %v2084 = vpop.f32.mrf.mxu0
    %v2085 = vadd.f32 %v2071, %v2084
    %2086 = vdwg.mxu0
    %2087 = vmatpush.bf16.msra.mxu0 %v1557
    %2088 = vmatpush.bf16.msra.mxu0 %v1551
    %2089 = vmatpush.bf16.msra.mxu0 %v1545
    %2090 = vmatpush.bf16.msra.mxu0 %v1539
    %2091 = vmatpush.bf16.msra.mxu0 %v1533
    %2092 = vmatpush.bf16.msra.mxu0 %v1527
    %2093 = vmatpush.bf16.msra.mxu0 %v1521
    %2094 = vmatpush.bf16.msra.mxu0 %v1515
    %2095 = vmatmul.bf16.gmra.mxu0 %v96
    %v2096 = vpop.f32.mrf.mxu0
    %v2097 = vadd.f32 %v2083, %v2096
    %v2098 = vpop.f32.mrf.mxu0
    %v2099 = vadd.f32 %v2085, %v2098
    %2100 = vdwg.mxu0
    %2101 = vmatpush.bf16.msra.mxu0 %v1318
    %2102 = vmatpush.bf16.msra.mxu0 %v1312
    %2103 = vmatpush.bf16.msra.mxu0 %v1306
    %2104 = vmatpush.bf16.msra.mxu0 %v1300
    %2105 = vmatpush.bf16.msra.mxu0 %v1294
    %2106 = vmatpush.bf16.msra.mxu0 %v1288
    %2107 = vmatpush.bf16.msra.mxu0 %v1282
    %2108 = vmatpush.bf16.msra.mxu0 %v1276
    %2109 = vmatmul.bf16.gmra.mxu0 %v91
    %v2110 = vpop.f32.mrf.mxu0
    %v2111 = vadd.f32 %v406, %v2110
    %v2112 = vpop.f32.mrf.mxu0
    %v2113 = vadd.f32 %v406, %v2112
    %2114 = vdwg.mxu0
    %2115 = vmatpush.bf16.msra.mxu0 %v1366
    %2116 = vmatpush.bf16.msra.mxu0 %v1360
    %2117 = vmatpush.bf16.msra.mxu0 %v1354
    %2118 = vmatpush.bf16.msra.mxu0 %v1348
    %2119 = vmatpush.bf16.msra.mxu0 %v1342
    %2120 = vmatpush.bf16.msra.mxu0 %v1336
    %2121 = vmatpush.bf16.msra.mxu0 %v1330
    %2122 = vmatpush.bf16.msra.mxu0 %v1324
    %2123 = vmatmul.bf16.gmra.mxu0 %v92
    %v2124 = vpop.f32.mrf.mxu0
    %v2125 = vadd.f32 %v2111, %v2124
    %v2126 = vpop.f32.mrf.mxu0
    %v2127 = vadd.f32 %v2113, %v2126
    %2128 = vdwg.mxu0
    %2129 = vmatpush.bf16.msra.mxu0 %v1414
    %2130 = vmatpush.bf16.msra.mxu0 %v1408
    %2131 = vmatpush.bf16.msra.mxu0 %v1402
    %2132 = vmatpush.bf16.msra.mxu0 %v1396
    %2133 = vmatpush.bf16.msra.mxu0 %v1390
    %2134 = vmatpush.bf16.msra.mxu0 %v1384
    %2135 = vmatpush.bf16.msra.mxu0 %v1378
    %2136 = vmatpush.bf16.msra.mxu0 %v1372
    %2137 = vmatmul.bf16.gmra.mxu0 %v93
    %v2138 = vpop.f32.mrf.mxu0
    %v2139 = vadd.f32 %v2125, %v2138
    %v2140 = vpop.f32.mrf.mxu0
    %v2141 = vadd.f32 %v2127, %v2140
    %2142 = vdwg.mxu0
    %2143 = vmatpush.bf16.msra.mxu0 %v1462
    %2144 = vmatpush.bf16.msra.mxu0 %v1456
    %2145 = vmatpush.bf16.msra.mxu0 %v1450
    %2146 = vmatpush.bf16.msra.mxu0 %v1444
    %2147 = vmatpush.bf16.msra.mxu0 %v1438
    %2148 = vmatpush.bf16.msra.mxu0 %v1432
    %2149 = vmatpush.bf16.msra.mxu0 %v1426
    %2150 = vmatpush.bf16.msra.mxu0 %v1420
    %2151 = vmatmul.bf16.gmra.mxu0 %v94
    %v2152 = vpop.f32.mrf.mxu0
    %v2153 = vadd.f32 %v2139, %v2152
    %v2154 = vpop.f32.mrf.mxu0
    %v2155 = vadd.f32 %v2141, %v2154
    %2156 = vdwg.mxu0
    %2157 = vmatpush.bf16.msra.mxu0 %v1510
    %2158 = vmatpush.bf16.msra.mxu0 %v1504
    %2159 = vmatpush.bf16.msra.mxu0 %v1498
    %2160 = vmatpush.bf16.msra.mxu0 %v1492
    %2161 = vmatpush.bf16.msra.mxu0 %v1486
    %2162 = vmatpush.bf16.msra.mxu0 %v1480
    %2163 = vmatpush.bf16.msra.mxu0 %v1474
    %2164 = vmatpush.bf16.msra.mxu0 %v1468
    %2165 = vmatmul.bf16.gmra.mxu0 %v95
    %v2166 = vpop.f32.mrf.mxu0
    %v2167 = vadd.f32 %v2153, %v2166
    %v2168 = vpop.f32.mrf.mxu0
    %v2169 = vadd.f32 %v2155, %v2168
    %2170 = vdwg.mxu0
    %2171 = vmatpush.bf16.msra.mxu0 %v1558
    %2172 = vmatpush.bf16.msra.mxu0 %v1552
    %2173 = vmatpush.bf16.msra.mxu0 %v1546
    %2174 = vmatpush.bf16.msra.mxu0 %v1540
    %2175 = vmatpush.bf16.msra.mxu0 %v1534
    %2176 = vmatpush.bf16.msra.mxu0 %v1528
    %2177 = vmatpush.bf16.msra.mxu0 %v1522
    %2178 = vmatpush.bf16.msra.mxu0 %v1516
    %2179 = vmatmul.bf16.gmra.mxu0 %v96
    %v2180 = vpop.f32.mrf.mxu0
    %v2181 = vadd.f32 %v2167, %v2180
    %v2182 = vpop.f32.mrf.mxu0
    %v2183 = vadd.f32 %v2169, %v2182
    %2184 = vdwg.mxu0
    %2185 = vmatpush.bf16.msra.mxu0 %v1319
    %2186 = vmatpush.bf16.msra.mxu0 %v1313
    %2187 = vmatpush.bf16.msra.mxu0 %v1307
    %2188 = vmatpush.bf16.msra.mxu0 %v1301
    %2189 = vmatpush.bf16.msra.mxu0 %v1295
    %2190 = vmatpush.bf16.msra.mxu0 %v1289
    %2191 = vmatpush.bf16.msra.mxu0 %v1283
    %2192 = vmatpush.bf16.msra.mxu0 %v1277
    %2193 = vmatmul.bf16.gmra.mxu0 %v91
    %v2194 = vpop.f32.mrf.mxu0
    %v2195 = vadd.f32 %v407, %v2194
    %v2196 = vpop.f32.mrf.mxu0
    %v2197 = vadd.f32 %v407, %v2196
    %2198 = vdwg.mxu0
    %2199 = vmatpush.bf16.msra.mxu0 %v1367
    %2200 = vmatpush.bf16.msra.mxu0 %v1361
    %2201 = vmatpush.bf16.msra.mxu0 %v1355
    %2202 = vmatpush.bf16.msra.mxu0 %v1349
    %2203 = vmatpush.bf16.msra.mxu0 %v1343
    %2204 = vmatpush.bf16.msra.mxu0 %v1337
    %2205 = vmatpush.bf16.msra.mxu0 %v1331
    %2206 = vmatpush.bf16.msra.mxu0 %v1325
    %2207 = vmatmul.bf16.gmra.mxu0 %v92
    %v2208 = vpop.f32.mrf.mxu0
    %v2209 = vadd.f32 %v2195, %v2208
    %v2210 = vpop.f32.mrf.mxu0
    %v2211 = vadd.f32 %v2197, %v2210
    %2212 = vdwg.mxu0
    %2213 = vmatpush.bf16.msra.mxu0 %v1415
    %2214 = vmatpush.bf16.msra.mxu0 %v1409
    %2215 = vmatpush.bf16.msra.mxu0 %v1403
    %2216 = vmatpush.bf16.msra.mxu0 %v1397
    %2217 = vmatpush.bf16.msra.mxu0 %v1391
    %2218 = vmatpush.bf16.msra.mxu0 %v1385
    %2219 = vmatpush.bf16.msra.mxu0 %v1379
    %2220 = vmatpush.bf16.msra.mxu0 %v1373
    %2221 = vmatmul.bf16.gmra.mxu0 %v93
    %v2222 = vpop.f32.mrf.mxu0
    %v2223 = vadd.f32 %v2209, %v2222
    %v2224 = vpop.f32.mrf.mxu0
    %v2225 = vadd.f32 %v2211, %v2224
    %2226 = vdwg.mxu0
    %2227 = vmatpush.bf16.msra.mxu0 %v1463
    %2228 = vmatpush.bf16.msra.mxu0 %v1457
    %2229 = vmatpush.bf16.msra.mxu0 %v1451
    %2230 = vmatpush.bf16.msra.mxu0 %v1445
    %2231 = vmatpush.bf16.msra.mxu0 %v1439
    %2232 = vmatpush.bf16.msra.mxu0 %v1433
    %2233 = vmatpush.bf16.msra.mxu0 %v1427
    %2234 = vmatpush.bf16.msra.mxu0 %v1421
    %2235 = vmatmul.bf16.gmra.mxu0 %v94
    %v2236 = vpop.f32.mrf.mxu0
    %v2237 = vadd.f32 %v2223, %v2236
    %v2238 = vpop.f32.mrf.mxu0
    %v2239 = vadd.f32 %v2225, %v2238
    %2240 = vdwg.mxu0
    %2241 = vmatpush.bf16.msra.mxu0 %v1511
    %2242 = vmatpush.bf16.msra.mxu0 %v1505
    %2243 = vmatpush.bf16.msra.mxu0 %v1499
    %2244 = vmatpush.bf16.msra.mxu0 %v1493
    %2245 = vmatpush.bf16.msra.mxu0 %v1487
    %2246 = vmatpush.bf16.msra.mxu0 %v1481
    %2247 = vmatpush.bf16.msra.mxu0 %v1475
    %2248 = vmatpush.bf16.msra.mxu0 %v1469
    %2249 = vmatmul.bf16.gmra.mxu0 %v95
    %v2250 = vpop.f32.mrf.mxu0
    %v2251 = vadd.f32 %v2237, %v2250
    %v2252 = vpop.f32.mrf.mxu0
    %v2253 = vadd.f32 %v2239, %v2252
    %2254 = vdwg.mxu0
    %2255 = vmatpush.bf16.msra.mxu0 %v1559
    %2256 = vmatpush.bf16.msra.mxu0 %v1553
    %2257 = vmatpush.bf16.msra.mxu0 %v1547
    %2258 = vmatpush.bf16.msra.mxu0 %v1541
    %2259 = vmatpush.bf16.msra.mxu0 %v1535
    %2260 = vmatpush.bf16.msra.mxu0 %v1529
    %2261 = vmatpush.bf16.msra.mxu0 %v1523
    %2262 = vmatpush.bf16.msra.mxu0 %v1517
    %2263 = vmatmul.bf16.gmra.mxu0 %v96
    %v2264 = vpop.f32.mrf.mxu0
    %v2265 = vadd.f32 %v2251, %v2264
    %v2266 = vpop.f32.mrf.mxu0
    %v2267 = vadd.f32 %v2253, %v2266
    %2268 = vdwg.mxu0
    %2269 = vmatpush.bf16.msra.mxu0 %v1320
    %2270 = vmatpush.bf16.msra.mxu0 %v1314
    %2271 = vmatpush.bf16.msra.mxu0 %v1308
    %2272 = vmatpush.bf16.msra.mxu0 %v1302
    %2273 = vmatpush.bf16.msra.mxu0 %v1296
    %2274 = vmatpush.bf16.msra.mxu0 %v1290
    %2275 = vmatpush.bf16.msra.mxu0 %v1284
    %2276 = vmatpush.bf16.msra.mxu0 %v1278
    %2277 = vmatmul.bf16.gmra.mxu0 %v91
    %v2278 = vpop.f32.mrf.mxu0
    %v2279 = vadd.f32 %v408, %v2278
    %v2280 = vpop.f32.mrf.mxu0
    %v2281 = vadd.f32 %v408, %v2280
    %2282 = vdwg.mxu0
    %2283 = vmatpush.bf16.msra.mxu0 %v1368
    %2284 = vmatpush.bf16.msra.mxu0 %v1362
    %2285 = vmatpush.bf16.msra.mxu0 %v1356
    %2286 = vmatpush.bf16.msra.mxu0 %v1350
    %2287 = vmatpush.bf16.msra.mxu0 %v1344
    %2288 = vmatpush.bf16.msra.mxu0 %v1338
    %2289 = vmatpush.bf16.msra.mxu0 %v1332
    %2290 = vmatpush.bf16.msra.mxu0 %v1326
    %2291 = vmatmul.bf16.gmra.mxu0 %v92
    %v2292 = vpop.f32.mrf.mxu0
    %v2293 = vadd.f32 %v2279, %v2292
    %v2294 = vpop.f32.mrf.mxu0
    %v2295 = vadd.f32 %v2281, %v2294
    %2296 = vdwg.mxu0
    %2297 = vmatpush.bf16.msra.mxu0 %v1416
    %2298 = vmatpush.bf16.msra.mxu0 %v1410
    %2299 = vmatpush.bf16.msra.mxu0 %v1404
    %2300 = vmatpush.bf16.msra.mxu0 %v1398
    %2301 = vmatpush.bf16.msra.mxu0 %v1392
    %2302 = vmatpush.bf16.msra.mxu0 %v1386
    %2303 = vmatpush.bf16.msra.mxu0 %v1380
    %2304 = vmatpush.bf16.msra.mxu0 %v1374
    %2305 = vmatmul.bf16.gmra.mxu0 %v93
    %v2306 = vpop.f32.mrf.mxu0
    %v2307 = vadd.f32 %v2293, %v2306
    %v2308 = vpop.f32.mrf.mxu0
    %v2309 = vadd.f32 %v2295, %v2308
    %2310 = vdwg.mxu0
    %2311 = vmatpush.bf16.msra.mxu0 %v1464
    %2312 = vmatpush.bf16.msra.mxu0 %v1458
    %2313 = vmatpush.bf16.msra.mxu0 %v1452
    %2314 = vmatpush.bf16.msra.mxu0 %v1446
    %2315 = vmatpush.bf16.msra.mxu0 %v1440
    %2316 = vmatpush.bf16.msra.mxu0 %v1434
    %2317 = vmatpush.bf16.msra.mxu0 %v1428
    %2318 = vmatpush.bf16.msra.mxu0 %v1422
    %2319 = vmatmul.bf16.gmra.mxu0 %v94
    %v2320 = vpop.f32.mrf.mxu0
    %v2321 = vadd.f32 %v2307, %v2320
    %v2322 = vpop.f32.mrf.mxu0
    %v2323 = vadd.f32 %v2309, %v2322
    %2324 = vdwg.mxu0
    %2325 = vmatpush.bf16.msra.mxu0 %v1512
    %2326 = vmatpush.bf16.msra.mxu0 %v1506
    %2327 = vmatpush.bf16.msra.mxu0 %v1500
    %2328 = vmatpush.bf16.msra.mxu0 %v1494
    %2329 = vmatpush.bf16.msra.mxu0 %v1488
    %2330 = vmatpush.bf16.msra.mxu0 %v1482
    %2331 = vmatpush.bf16.msra.mxu0 %v1476
    %2332 = vmatpush.bf16.msra.mxu0 %v1470
    %2333 = vmatmul.bf16.gmra.mxu0 %v95
    %v2334 = vpop.f32.mrf.mxu0
    %v2335 = vadd.f32 %v2321, %v2334
    %v2336 = vpop.f32.mrf.mxu0
    %v2337 = vadd.f32 %v2323, %v2336
    %2338 = vdwg.mxu0
    %2339 = vmatpush.bf16.msra.mxu0 %v1560
    %2340 = vmatpush.bf16.msra.mxu0 %v1554
    %2341 = vmatpush.bf16.msra.mxu0 %v1548
    %2342 = vmatpush.bf16.msra.mxu0 %v1542
    %2343 = vmatpush.bf16.msra.mxu0 %v1536
    %2344 = vmatpush.bf16.msra.mxu0 %v1530
    %2345 = vmatpush.bf16.msra.mxu0 %v1524
    %2346 = vmatpush.bf16.msra.mxu0 %v1518
    %2347 = vmatmul.bf16.gmra.mxu0 %v96
    %v2348 = vpop.f32.mrf.mxu0
    %v2349 = vadd.f32 %v2335, %v2348
    %v2350 = vpop.f32.mrf.mxu0
    %v2351 = vadd.f32 %v2337, %v2350
    %2352 = vdwg.mxu0
    %v2353 = vld [vmem:[#allocation5] sm:$0xff]
    %v2354 = vld [vmem:[#allocation5 + $0x8] sm:$0xff]
    %v2355 = vld [vmem:[#allocation5 + $0x10] sm:$0xff]
    %v2356 = vld [vmem:[#allocation5 + $0x18] sm:$0xff]
    %v2357 = vld [vmem:[#allocation5 + $0x20] sm:$0xff]
    %v2358 = vld [vmem:[#allocation5 + $0x28] sm:$0xff]
    %v2359 = vld [vmem:[#allocation5 + $0x30] sm:$0xff]
    %v2360 = vld [vmem:[#allocation5 + $0x38] sm:$0xff]
    %v2361 = vld [vmem:[#allocation5 + $0x40] sm:$0xff]
    %v2362 = vld [vmem:[#allocation5 + $0x48] sm:$0xff]
    %v2363 = vld [vmem:[#allocation5 + $0x50] sm:$0xff]
    %v2364 = vld [vmem:[#allocation5 + $0x58] sm:$0xff]
    %v2365 = vadd.f32 %v1929, %v2353
    %v2366 = vadd.f32 %v2013, %v2354
    %v2367 = vadd.f32 %v2097, %v2355
    %v2368 = vadd.f32 %v2181, %v2356
    %v2369 = vadd.f32 %v2265, %v2357
    %v2370 = vadd.f32 %v2349, %v2358
    %v2371 = vadd.f32 %v1931, %v2359
    %v2372 = vadd.f32 %v2015, %v2360
    %v2373 = vadd.f32 %v2099, %v2361
    %v2374 = vadd.f32 %v2183, %v2362
    %v2375 = vadd.f32 %v2267, %v2363
    %v2376 = vadd.f32 %v2351, %v2364
    %v2377 = vadd.f32 %v2365, %v2366
    %v2378 = vadd.f32 %v2377, %v2367
    %v2379 = vadd.f32 %v2378, %v2368
    %v2380 = vadd.f32 %v2379, %v2369
    %v2381 = vadd.f32 %v2380, %v2370
    %2382 = vadd.xlane.f32.xlu0 %v2381
    %v2383 = vpop.xlane.xlu0 %2382
    %v2384 = vadd.f32 %v2371, %v2372
    %v2385 = vadd.f32 %v2384, %v2373
    %v2386 = vadd.f32 %v2385, %v2374
    %v2387 = vadd.f32 %v2386, %v2375
    %v2388 = vadd.f32 %v2387, %v2376
    %2389 = vadd.xlane.f32.xlu0 %v2388
    %v2390 = vpop.xlane.xlu0 %2389
    %v2391 = vrcp.pop 768.0
    %v2392 = vmul.f32 768.0, %v2391
    %v2393 = vsub.f32 1.0, %v2392
    %v2394 = vmul.f32 %v2391, %v2393
    %v2395 = vadd.f32 %v2391, %v2394
    %vm2396 = vweird.f32 %v2391
    %v2397 = vsel %vm2396, %v2391, %v2395
    %v2398 = vmul.f32 %v2383, %v2397
    %v2399 = vmul.f32 %v2390, %v2397
    %v2400 = vsub.f32 %v2365, %v2398
    %v2401 = vsub.f32 %v2366, %v2398
    %v2402 = vsub.f32 %v2367, %v2398
    %v2403 = vsub.f32 %v2368, %v2398
    %v2404 = vsub.f32 %v2369, %v2398
    %v2405 = vsub.f32 %v2370, %v2398
    %v2406 = vsub.f32 %v2371, %v2399
    %v2407 = vsub.f32 %v2372, %v2399
    %v2408 = vsub.f32 %v2373, %v2399
    %v2409 = vsub.f32 %v2374, %v2399
    %v2410 = vsub.f32 %v2375, %v2399
    %v2411 = vsub.f32 %v2376, %v2399
    %v2412 = vmul.f32 %v2400, %v2400
    %v2413 = vmul.f32 %v2401, %v2401
    %v2414 = vmul.f32 %v2402, %v2402
    %v2415 = vmul.f32 %v2403, %v2403
    %v2416 = vmul.f32 %v2404, %v2404
    %v2417 = vmul.f32 %v2405, %v2405
    %v2418 = vmul.f32 %v2406, %v2406
    %v2419 = vmul.f32 %v2407, %v2407
    %v2420 = vmul.f32 %v2408, %v2408
    %v2421 = vmul.f32 %v2409, %v2409
    %v2422 = vmul.f32 %v2410, %v2410
    %v2423 = vmul.f32 %v2411, %v2411
    %v2424 = vadd.f32 %v2412, %v2413
    %v2425 = vadd.f32 %v2424, %v2414
    %v2426 = vadd.f32 %v2425, %v2415
    %v2427 = vadd.f32 %v2426, %v2416
    %v2428 = vadd.f32 %v2427, %v2417
    %2429 = vadd.xlane.f32.xlu0 %v2428
    %v2430 = vpop.xlane.xlu0 %2429
    %v2431 = vadd.f32 %v2418, %v2419
    %v2432 = vadd.f32 %v2431, %v2420
    %v2433 = vadd.f32 %v2432, %v2421
    %v2434 = vadd.f32 %v2433, %v2422
    %v2435 = vadd.f32 %v2434, %v2423
    %2436 = vadd.xlane.f32.xlu0 %v2435
    %v2437 = vpop.xlane.xlu0 %2436
    %v2438 = vmul.f32 %v2430, %v2397
    %v2439 = vmul.f32 %v2437, %v2397
    %v2440 = vadd.f32 %v2438, 1e-12
    %v2441 = vadd.f32 %v2439, 1e-12
    %v2442 = vrsqrt.pop %v2440
    %v2443 = vmul.f32 %v2442, %v2440
    %v2444 = vmul.f32 %v2443, %v2442
    %v2445 = vmul.f32 0.5, %v2444
    %v2446 = vsub.f32 1.5, %v2445
    %v2447 = vmul.f32 %v2442, %v2446
    %vm2448 = vweird.f32 %v2440
    %vm2449 = vweird.f32 %v2442
    %vm2450 = vmor %vm2448, %vm2449
    %v2451 = vsel %vm2450, %v2442, %v2447
    %v2452 = vrsqrt.pop %v2441
    %v2453 = vmul.f32 %v2452, %v2441
    %v2454 = vmul.f32 %v2453, %v2452
    %v2455 = vmul.f32 0.5, %v2454
    %v2456 = vsub.f32 1.5, %v2455
    %v2457 = vmul.f32 %v2452, %v2456
    %vm2458 = vweird.f32 %v2441
    %vm2459 = vweird.f32 %v2452
    %vm2460 = vmor %vm2458, %vm2459
    %v2461 = vsel %vm2460, %v2452, %v2457
    %v2462 = vmul.f32 %v2400, %v2451
    %v2463 = vmul.f32 %v2401, %v2451
    %v2464 = vmul.f32 %v2402, %v2451
    %v2465 = vmul.f32 %v2403, %v2451
    %v2466 = vmul.f32 %v2404, %v2451
    %v2467 = vmul.f32 %v2405, %v2451
    %v2468 = vmul.f32 %v2406, %v2461
    %v2469 = vmul.f32 %v2407, %v2461
    %v2470 = vmul.f32 %v2408, %v2461
    %v2471 = vmul.f32 %v2409, %v2461
    %v2472 = vmul.f32 %v2410, %v2461
    %v2473 = vmul.f32 %v2411, %v2461
    %v2474 = vperm.slane %v385, 1
    %v2475 = vperm.slane %v385, 5
    %v2476 = vperm.slane %v386, 1
    %v2477 = vperm.slane %v386, 5
    %v2478 = vperm.slane %v387, 1
    %v2479 = vperm.slane %v387, 5
    %v2486 = vperm.slane %v2474, 1
    %v2487 = vperm.slane %v2475, 1
    %v2488 = vperm.slane %v2476, 1
    %v2489 = vperm.slane %v2477, 1
    %v2490 = vperm.slane %v2478, 1
    %v2491 = vperm.slane %v2479, 1
    %v2492 = vmul.f32 %v2462, %v2486
    %v2493 = vmul.f32 %v2463, %v2487
    %v2494 = vmul.f32 %v2464, %v2488
    %v2495 = vmul.f32 %v2465, %v2489
    %v2496 = vmul.f32 %v2466, %v2490
    %v2497 = vmul.f32 %v2467, %v2491
    %v2498 = vmul.f32 %v2468, %v2486
    %v2499 = vmul.f32 %v2469, %v2487
    %v2500 = vmul.f32 %v2470, %v2488
    %v2501 = vmul.f32 %v2471, %v2489
    %v2502 = vmul.f32 %v2472, %v2490
    %v2503 = vmul.f32 %v2473, %v2491
    %v2504 = vperm.slane %v385, 2
    %v2505 = vperm.slane %v385, 6
    %v2506 = vperm.slane %v386, 2
    %v2507 = vperm.slane %v386, 6
    %v2508 = vperm.slane %v387, 2
    %v2509 = vperm.slane %v387, 6
    %v2516 = vperm.slane %v2504, 2
    %v2517 = vperm.slane %v2505, 2
    %v2518 = vperm.slane %v2506, 2
    %v2519 = vperm.slane %v2507, 2
    %v2520 = vperm.slane %v2508, 2
    %v2521 = vperm.slane %v2509, 2
    %v2522 = vadd.f32 %v2492, %v2516
    %v2523 = vadd.f32 %v2493, %v2517
    %v2524 = vadd.f32 %v2494, %v2518
    %v2525 = vadd.f32 %v2495, %v2519
    %v2526 = vadd.f32 %v2496, %v2520
    %v2527 = vadd.f32 %v2497, %v2521
    %v2528 = vadd.f32 %v2498, %v2516
    %v2529 = vadd.f32 %v2499, %v2517
    %v2530 = vadd.f32 %v2500, %v2518
    %v2531 = vadd.f32 %v2501, %v2519
    %v2532 = vadd.f32 %v2502, %v2520
    %v2533 = vadd.f32 %v2503, %v2521
    %2534 = vst [vmem:[#allocation10] sm:$0xff] %v2522
    %2535 = vst [vmem:[#allocation10 + $0x8] sm:$0xff] %v2523
    %2536 = vst [vmem:[#allocation10 + $0x10] sm:$0xff] %v2524
    %2537 = vst [vmem:[#allocation10 + $0x18] sm:$0xff] %v2525
    %2538 = vst [vmem:[#allocation10 + $0x20] sm:$0xff] %v2526
    %2539 = vst [vmem:[#allocation10 + $0x28] sm:$0xff] %v2527
    %2540 = vst [vmem:[#allocation10 + $0x30] sm:$0xff] %v2528
    %2541 = vst [vmem:[#allocation10 + $0x38] sm:$0xff] %v2529
    %2542 = vst [vmem:[#allocation10 + $0x40] sm:$0xff] %v2530
    %2543 = vst [vmem:[#allocation10 + $0x48] sm:$0xff] %v2531
    %2544 = vst [vmem:[#allocation10 + $0x50] sm:$0xff] %v2532
    %2545 = vst [vmem:[#allocation10 + $0x58] sm:$0xff] %v2533
    // Predicated region
    $region34: #{tpu_custom_call.1} parent=1 // pred_check
      _
    $region35: #{tpu_custom_call.1} parent=1 // pred_check_branch
      %2547 = sbr.rel (0) target = $region37
    $region36: #{tpu_custom_call.1} parent=1 // pred_region
      %2549 = vsyncadd [#allocation4], 0
      %s2550 = sshll.u32 [#allocation10], 4
      %s2551 = int_to_ptr.vmem [resolvable:$true] %s2550
      %s2552 = sshll.u32 %s4, 4
      %s2553 = int_to_ptr.hbm [resolvable:$true] %s2552
      %2558 = dma.vmem_to_hbm [thread:$0]  %s2551, 1536, %s2553, [#allocation4], 768, 768, 48
    $region37: #{tpu_custom_call.1} parent=1 // pred_fallthru
      _
    // Predicated region
    $region38: #{tpu_custom_call.1} parent=1 // pred_check
      _
    $region39: #{tpu_custom_call.1} parent=1 // pred_check_branch
      %2560 = sbr.rel (0) target = $region41
    $region40: #{tpu_custom_call.1} parent=1 // pred_region
      %2562 = dma.done [#allocation4], 1536
    $region41: #{tpu_custom_call.1} parent=1 // pred_fallthru
      _
    %2563 = vsyncpa [#allocation3], 1
    %2564 = vsyncpa [#allocation6], 1
    %2565 = vsyncpa [#allocation9], 1
    %2566 = vsyncpa [#allocation4], 1

</llo_original>
